<compile_context>
chip_gen: v7x
topology: tpu7x:2x2x1
jax: 0.10.0
libtpu: 0.0.40
codegen_flags: <defaults>
</compile_context>

<pallas_src>
import jax
import jax.numpy as jnp
from jax.experimental import pallas as pl
from jax.experimental.pallas import tpu as pltpu


# Safe on every generation: fits v7x's 64 MiB/TC with headroom for compiler
# scratch + the x/out double buffers. v5e/v6e have 128 MiB — pass a larger
# limit (e.g. ~100 MiB) there if you raise tb_max to 1024 or run huge param_dim.
_VMEM_LIMIT = 48 * 1024 * 1024
_TB_MAX_DEFAULT = 512      # multiple of 256 (v6e/v7x MXU M-fill) and 128 (v5e)
_K_SPLIT_DEFAULT = 2048    # param_dim above which layer-1 gets a K-reduction axis
_TK_DEFAULT = 512          # K chunk for the layer-1 reduction axis


# --------------------------------------------------------------------------
# Kernels
# --------------------------------------------------------------------------

def _encoder_prefetch_kernel(x_ref, w1_ref, b1_ref,
                             w2_hbm, b2_hbm, w3_hbm, b3_hbm, w4_hbm, b4_hbm,
                             o_ref,
                             w2_v, b2_v, w3_v, b3_v, w4_v, b4_v, sem):
    """Single-tile latency path: overlap tail-weight DMAs with layer-1 compute."""
    # Kick off the layer-2..4 weight/bias DMAs immediately; they run in the
    # background while the layer-1 matmul executes on the MXU.
    copies = [
        pltpu.make_async_copy(w2_hbm, w2_v, sem.at[0]),
        pltpu.make_async_copy(b2_hbm, b2_v, sem.at[1]),
        pltpu.make_async_copy(w3_hbm, w3_v, sem.at[2]),
        pltpu.make_async_copy(b3_hbm, b3_v, sem.at[3]),
        pltpu.make_async_copy(w4_hbm, w4_v, sem.at[4]),
        pltpu.make_async_copy(b4_hbm, b4_v, sem.at[5]),
    ]
    for cp in copies:
        cp.start()

    # Layer 1: bf16 operands into the MXU (in-kernel cast of x), f32 accumulate.
    x = x_ref[...].astype(jnp.bfloat16)
    h = jnp.dot(x, w1_ref[...], preferred_element_type=jnp.float32) + b1_ref[...]
    h = jnp.maximum(h, 0.0).astype(jnp.bfloat16)

    # Layer 2
    copies[0].wait()
    copies[1].wait()
    h = jnp.dot(h, w2_v[...], preferred_element_type=jnp.float32) + b2_v[...]
    h = jnp.maximum(h, 0.0).astype(jnp.bfloat16)

    # Layer 3
    copies[2].wait()
    copies[3].wait()
    h = jnp.dot(h, w3_v[...], preferred_element_type=jnp.float32) + b3_v[...]
    h = jnp.maximum(h, 0.0).astype(jnp.bfloat16)

    # Layer 4 (no ReLU)
    copies[4].wait()
    copies[5].wait()
    out = jnp.dot(h, w4_v[...], preferred_element_type=jnp.float32) + b4_v[...]
    o_ref[...] = out.astype(o_ref.dtype)


def _encoder_tiled_kernel(x_ref, w1_ref, b1_ref, w2_ref, b2_ref,
                          w3_ref, b3_ref, w4_ref, b4_ref, o_ref, acc_ref):
    """Batch-tiled path; grid = (batch_tiles, k_tiles). Layer-1 accumulates over
    the K axis into an f32 VMEM scratch; layers 2..4 + output run on the last
    K step (pl.when finalize)."""
    k = pl.program_id(1)

    @pl.when(k == 0)
    def _init():
        acc_ref[...] = jnp.zeros_like(acc_ref)

    acc_ref[...] += jnp.dot(x_ref[...].astype(jnp.bfloat16), w1_ref[...],
                            preferred_element_type=jnp.float32)

    @pl.when(k == pl.num_programs(1) - 1)
    def _finalize():
        h = jnp.maximum(acc_ref[...] + b1_ref[...], 0.0).astype(jnp.bfloat16)
        h = jnp.dot(h, w2_ref[...], preferred_element_type=jnp.float32) + b2_ref[...]
        h = jnp.maximum(h, 0.0).astype(jnp.bfloat16)
        h = jnp.dot(h, w3_ref[...], preferred_element_type=jnp.float32) + b3_ref[...]
        h = jnp.maximum(h, 0.0).astype(jnp.bfloat16)
        out = jnp.dot(h, w4_ref[...], preferred_element_type=jnp.float32) + b4_ref[...]
        o_ref[...] = out.astype(o_ref.dtype)


# --------------------------------------------------------------------------
# pallas_call wrappers
# --------------------------------------------------------------------------

def _forward_prefetch(xk, w1, b1, w2, b2, w3, b3, w4, b4,
                      out_shape, cost, vmem_limit):
    B, kp = xk.shape
    d1, d2, d3, ed = w1.shape[1], w2.shape[1], w3.shape[1], w4.shape[1]
    zero = lambda i: (0, 0)
    hbm = pl.BlockSpec(memory_space=pl.ANY)   # raw HBM ref -> manual DMA

    return pl.pallas_call(
        _encoder_prefetch_kernel,
        out_shape=out_shape,
        grid=(1,),
        in_specs=[
            pl.BlockSpec((B, kp), zero),    # x (f32, cast to bf16 in kernel)
            pl.BlockSpec((kp, d1), zero),   # w1 (needed first -> auto-pipelined)
            pl.BlockSpec((1, d1), zero),    # b1
            hbm, hbm, hbm, hbm, hbm, hbm,   # w2, b2, w3, b3, w4, b4
        ],
        out_specs=pl.BlockSpec((B, ed), zero),
        scratch_shapes=[
            pltpu.VMEM((d1, d2), jnp.bfloat16),   # w2
            pltpu.VMEM((1, d2), jnp.float32),     # b2
            pltpu.VMEM((d2, d3), jnp.bfloat16),   # w3
            pltpu.VMEM((1, d3), jnp.float32),     # b3
            pltpu.VMEM((d3, ed), jnp.bfloat16),   # w4
            pltpu.VMEM((1, ed), jnp.float32),     # b4
            pltpu.SemaphoreType.DMA((6,)),
        ],
        compiler_params=pltpu.CompilerParams(
            dimension_semantics=("arbitrary",),
            vmem_limit_bytes=vmem_limit,
        ),
        cost_estimate=cost,
    )(xk, w1, b1, w2, b2, w3, b3, w4, b4)


def _forward_tiled(xk, w1, b1, w2, b2, w3, b3, w4, b4,
                   out_shape, cost, vmem_limit, *, tb, tk):
    B, kp = xk.shape
    d1, d2, d3, ed = w1.shape[1], w2.shape[1], w3.shape[1], w4.shape[1]
    nb = pl.cdiv(B, tb)
    nk = kp // tk   # kp is guaranteed to be a multiple of tk by the caller

    def call(single_buffer_weights):
        # Resident weights/biases (constant index maps) never get re-fetched,
        # so double-buffering them is pure VMEM waste -> single-buffer them.
        kw = {"pipeline_mode": pl.Buffered(1)} if single_buffer_weights else {}
        const = lambda i, k: (0, 0)
        in_specs = [
            pl.BlockSpec((tb, tk), lambda i, k: (i, k)),   # x tile
            pl.BlockSpec((tk, d1), lambda i, k: (k, 0)),   # w1 (K-tiled)
            pl.BlockSpec((1, d1), const, **kw),            # b1
            pl.BlockSpec((d1, d2), const, **kw),           # w2
            pl.BlockSpec((1, d2), const, **kw),            # b2
            pl.BlockSpec((d2, d3), const, **kw),           # w3
            pl.BlockSpec((1, d3), const, **kw),            # b3
            pl.BlockSpec((d3, ed), const, **kw),           # w4
            pl.BlockSpec((1, ed), const, **kw),            # b4
        ]
        return pl.pallas_call(
            _encoder_tiled_kernel,
            out_shape=out_shape,
            grid=(nb, nk),
            in_specs=in_specs,
            out_specs=pl.BlockSpec((tb, ed), lambda i, k: (i, 0)),
            scratch_shapes=[pltpu.VMEM((tb, d1), jnp.float32)],   # layer-1 acc
            compiler_params=pltpu.CompilerParams(
                # batch axis parallel (v7x megacore), K-reduction axis arbitrary
                dimension_semantics=("parallel", "arbitrary"),
                vmem_limit_bytes=vmem_limit,
            ),
            cost_estimate=cost,
        )(xk, w1, b1, w2, b2, w3, b3, w4, b4)

    try:
        return call(True)
    except Exception:
        # pipeline_mode=pl.Buffered(1) not supported on this jax/libtpu build;
        # fall back to default double-buffering (correct, slightly more VMEM).
        return call(False)


# --------------------------------------------------------------------------
# Public API
# --------------------------------------------------------------------------

def prepare_encoder_params(params):
    """One-time parameter prep (do this at load time, not per forward call):
      * weights -> bf16 (bf16 MXU fast path, halves weight HBM traffic)
      * biases  -> f32 (1, d)  (bias-add / ReLU stay f32; v5e VPU is f32-only)
      * w1's K (param_dim) zero-padded up to a multiple of 128 when small, so
        layer-1 loads / the MXU K-feed are lane-dense instead of masked.
    """
    out = {}
    for i in (1, 2, 3, 4):
        out[f"w{i}"] = params[f"w{i}"].astype(jnp.bfloat16)
        out[f"b{i}"] = params[f"b{i}"].astype(jnp.float32).reshape(1, -1)
    k = out["w1"].shape[0]
    if k % 128 != 0 and k < 1024:   # skip the pad when K is large / already aligned
        kp = 128 * pl.cdiv(k, 128)
        out["w1"] = jnp.pad(out["w1"], ((0, kp - k), (0, 0)))
    return out


def encoder_forward(x, params, *, tb_max=_TB_MAX_DEFAULT,
                    k_split=_K_SPLIT_DEFAULT, tk=_TK_DEFAULT,
                    vmem_limit_bytes=_VMEM_LIMIT):
    """x: (B, param_dim) float32. params: either raw f32 params from
    init_encoder_params / PyTorch (converted on the fly) or the output of
    prepare_encoder_params (preferred: hoists the one-time weight cast).
    Returns (B, embed_dim) float32."""
    assert tb_max % 8 == 0 and tk % 128 == 0
    B, param_dim = x.shape

    p = params if params["w1"].dtype == jnp.bfloat16 else prepare_encoder_params(params)
    w1, b1 = p["w1"], p["b1"]
    w2, b2 = p["w2"], p["b2"]
    w3, b3 = p["w3"], p["b3"]
    w4, b4 = p["w4"], p["b4"]
    kp = w1.shape[0]
    d1, d2, d3, ed = w1.shape[1], w2.shape[1], w3.shape[1], w4.shape[1]

    # x stays f32 (cast to bf16 inside the kernel); only lane-pad its K dim when
    # the prepared w1 was lane-padded (small param_dim -> cheap).
    xk = x if kp == param_dim else jnp.pad(x, ((0, 0), (0, kp - param_dim)))

    # Batch tile: the whole batch when it fits (single grid step, latency path),
    # otherwise tb_max rows (multiple of 256 -> good MXU M-fill on v6e/v7x).
    tb = B if B <= tb_max else tb_max
    nb = pl.cdiv(B, tb)

    flops = 2 * B * (kp * d1 + d1 * d2 + d2 * d3 + d3 * ed)
    bytes_accessed = (xk.size * 4
                      + (w1.size + w2.size + w3.size + w4.size) * 2
                      + (b1.size + b2.size + b3.size + b4.size) * 4
                      + B * ed * 4)
    cost = pl.CostEstimate(flops=flops, transcendentals=0,
                           bytes_accessed=bytes_accessed)
    out_shape = jax.ShapeDtypeStruct((B, ed), jnp.float32)

    if nb == 1 and kp <= k_split:
        # Small-batch latency path: overlap tail-weight DMA with layer-1 compute.
        return _forward_prefetch(xk, w1, b1, w2, b2, w3, b3, w4, b4,
                                 out_shape, cost, vmem_limit_bytes)

    if kp > k_split:
        # Layer-1 K-reduction split so x / w1 tiles stay within VMEM (v7x 64 MiB).
        if kp % tk != 0:
            kpad = tk * pl.cdiv(kp, tk)
            xk = jnp.pad(xk, ((0, 0), (0, kpad - kp)))
            w1 = jnp.pad(w1, ((0, kpad - kp), (0, 0)))
            kp = kpad
        tk_eff = tk
    else:
        tk_eff = kp   # single K step

    return _forward_tiled(xk, w1, b1, w2, b2, w3, b3, w4, b4,
                          out_shape, cost, vmem_limit_bytes, tb=tb, tk=tk_eff)


# --------------------------------------------------------------------------
# Reference + init (PyTorch-equivalent)
# --------------------------------------------------------------------------

def init_encoder_params(key, param_dim, embed_dim=8):
    """Deterministic init matching PyTorch nn.Linear default:
    U(-1/sqrt(fan_in), 1/sqrt(fan_in)) for both weight and bias."""
    dims = [(param_dim, 1024), (1024, 512), (512, 128), (128, embed_dim)]
    params = {}
    keys = jax.random.split(key, 2 * len(dims))
    for i, (fan_in, fan_out) in enumerate(dims):
        bound = 1.0 / (fan_in ** 0.5)
        params[f"w{i + 1}"] = jax.random.uniform(
            keys[2 * i], (fan_in, fan_out), minval=-bound, maxval=bound,
            dtype=jnp.float32)
        params[f"b{i + 1}"] = jax.random.uniform(
            keys[2 * i + 1], (1, fan_out), minval=-bound, maxval=bound,
            dtype=jnp.float32)
    return params


def encoder_reference(x, params, *, bf16_dots=False):
    """Pure-JAX reference. With bf16_dots=True, mirrors the kernel's precision
    (bf16 dot inputs, f32 accumulation / bias / ReLU)."""
    cast = (lambda a: a.astype(jnp.bfloat16)) if bf16_dots else (lambda a: a)
    h = jnp.dot(cast(x), cast(params["w1"]),
                preferred_element_type=jnp.float32) + params["b1"]
    h = jnp.maximum(h, 0.0)
    h = jnp.dot(cast(h), cast(params["w2"]),
                preferred_element_type=jnp.float32) + params["b2"]
    h = jnp.maximum(h, 0.0)
    h = jnp.dot(cast(h), cast(params["w3"]),
                preferred_element_type=jnp.float32) + params["b3"]
    h = jnp.maximum(h, 0.0)
    return jnp.dot(cast(h), cast(params["w4"]),
                   preferred_element_type=jnp.float32) + params["b4"]


if __name__ == "__main__":
    key = jax.random.PRNGKey(0)
    k_p1, k_x1, k_p2, k_x2, k_p3, k_x3 = jax.random.split(key, 6)

    # --- Case 1: small-batch latency path (manual tail-weight prefetch) -----
    batch, param_dim, embed_dim = 2, 32, 8
    params1 = init_encoder_params(k_p1, param_dim, embed_dim)
    x1 = jax.random.normal(k_x1, (batch, param_dim), dtype=jnp.float32)
    out1 = jax.block_until_ready(encoder_forward(x1, params1))
    assert out1.shape == (batch, embed_dim), out1.shape
    ref1_bf16 = encoder_reference(x1, params1, bf16_dots=True)
    ref1_f32 = encoder_reference(x1, params1, bf16_dots=False)
    assert jnp.allclose(out1, ref1_bf16, atol=1e-2, rtol=1e-2), \
        "case1: mismatch vs bf16-precision reference"
    assert jnp.allclose(out1, ref1_f32, atol=5e-2, rtol=5e-2), \
        "case1: mismatch vs f32 reference"

    # --- Case 2: multi-tile batch path (resident single-buffered weights) ---
    batch2 = 16
    params2 = init_encoder_params(k_p2, param_dim, embed_dim)
    x2 = jax.random.normal(k_x2, (batch2, param_dim), dtype=jnp.float32)
    out2 = jax.block_until_ready(encoder_forward(x2, params2, tb_max=8))
    assert out2.shape == (batch2, embed_dim), out2.shape
    assert jnp.allclose(out2, encoder_reference(x2, params2, bf16_dots=True),
                        atol=2e-2, rtol=2e-2), \
        "case2: mismatch vs bf16-precision reference"

    # --- Case 3: layer-1 K-split path (large param_dim, scaled down to test) -
    param_dim3, batch3 = 256, 4
    params3 = init_encoder_params(k_p3, param_dim3, embed_dim)
    x3 = jax.random.normal(k_x3, (batch3, param_dim3), dtype=jnp.float32)
    out3 = jax.block_until_ready(
        encoder_forward(x3, params3, k_split=128, tk=128))
    assert out3.shape == (batch3, embed_dim), out3.shape
    assert jnp.allclose(out3, encoder_reference(x3, params3, bf16_dots=True),
                        atol=2e-2, rtol=2e-2), \
        "case3: mismatch vs bf16-precision reference"

    print("KERNEL_OK")
</pallas_src>

<mosaic_0001>
module attributes {stable_mosaic.version = 11 : i64} {
  func.func @_encoder_prefetch_kernel(%arg0: i32, %arg1: memref<2x128xf32, #tpu.memory_space<vmem>>, %arg2: memref<128x1024xbf16, #tpu.memory_space<vmem>>, %arg3: memref<1x1024xf32, #tpu.memory_space<vmem>>, %arg4: memref<1024x512xbf16, #tpu.memory_space<any>>, %arg5: memref<1x512xf32, #tpu.memory_space<any>>, %arg6: memref<512x128xbf16, #tpu.memory_space<any>>, %arg7: memref<1x128xf32, #tpu.memory_space<any>>, %arg8: memref<128x8xbf16, #tpu.memory_space<any>>, %arg9: memref<1x8xf32, #tpu.memory_space<any>>, %arg10: memref<2x8xf32, #tpu.memory_space<vmem>>, %arg11: memref<1024x512xbf16, #tpu.memory_space<vmem>>, %arg12: memref<1x512xf32, #tpu.memory_space<vmem>>, %arg13: memref<512x128xbf16, #tpu.memory_space<vmem>>, %arg14: memref<1x128xf32, #tpu.memory_space<vmem>>, %arg15: memref<128x8xbf16, #tpu.memory_space<vmem>>, %arg16: memref<1x8xf32, #tpu.memory_space<vmem>>, %arg17: memref<6x!tpu.dma_semaphore, #tpu.memory_space<semaphore_mem>>) attributes {dimension_semantics = [#tpu.dimension_semantics<arbitrary>], iteration_bounds = array<i64: 1>, scalar_prefetch = 0 : i64, scratch_operands = 7 : i64, tpu.core_type = #tpu.core_type<tc>, window_params = [{pipeline_mode = #tpu.pipeline_mode<synchronous>, transform_indices = @transform_0, window_bounds = array<i64: 2, 128>}, {pipeline_mode = #tpu.pipeline_mode<synchronous>, transform_indices = @transform_1, window_bounds = array<i64: 128, 1024>}, {pipeline_mode = #tpu.pipeline_mode<synchronous>, transform_indices = @transform_2, window_bounds = array<i64: 1, 1024>}, {}, {}, {}, {}, {}, {}, {pipeline_mode = #tpu.pipeline_mode<synchronous>, transform_indices = @transform_9, window_bounds = array<i64: 2, 8>}]} {
    %c0_i32 = arith.constant 0 : i32
    %0 = tpu.memref_slice %arg17[%c0_i32] : memref<6x!tpu.dma_semaphore, #tpu.memory_space<semaphore_mem>> -> memref<1x!tpu.dma_semaphore, #tpu.memory_space<semaphore_mem>>
    %1 = tpu.memref_squeeze %0 : memref<1x!tpu.dma_semaphore, #tpu.memory_space<semaphore_mem>> -> memref<!tpu.dma_semaphore, #tpu.memory_space<semaphore_mem>>
    tpu.enqueue_dma source(%arg4 : memref<1024x512xbf16, #tpu.memory_space<any>>) target(%arg11 : memref<1024x512xbf16, #tpu.memory_space<vmem>>) target_semaphore(%1 : memref<!tpu.dma_semaphore, #tpu.memory_space<semaphore_mem>>)
    %c1_i32 = arith.constant 1 : i32
    %2 = tpu.memref_slice %arg17[%c1_i32] : memref<6x!tpu.dma_semaphore, #tpu.memory_space<semaphore_mem>> -> memref<1x!tpu.dma_semaphore, #tpu.memory_space<semaphore_mem>>
    %3 = tpu.memref_squeeze %2 : memref<1x!tpu.dma_semaphore, #tpu.memory_space<semaphore_mem>> -> memref<!tpu.dma_semaphore, #tpu.memory_space<semaphore_mem>>
    tpu.enqueue_dma source(%arg5 : memref<1x512xf32, #tpu.memory_space<any>>) target(%arg12 : memref<1x512xf32, #tpu.memory_space<vmem>>) target_semaphore(%3 : memref<!tpu.dma_semaphore, #tpu.memory_space<semaphore_mem>>)
    %c2_i32 = arith.constant 2 : i32
    %4 = tpu.memref_slice %arg17[%c2_i32] : memref<6x!tpu.dma_semaphore, #tpu.memory_space<semaphore_mem>> -> memref<1x!tpu.dma_semaphore, #tpu.memory_space<semaphore_mem>>
    %5 = tpu.memref_squeeze %4 : memref<1x!tpu.dma_semaphore, #tpu.memory_space<semaphore_mem>> -> memref<!tpu.dma_semaphore, #tpu.memory_space<semaphore_mem>>
    tpu.enqueue_dma source(%arg6 : memref<512x128xbf16, #tpu.memory_space<any>>) target(%arg13 : memref<512x128xbf16, #tpu.memory_space<vmem>>) target_semaphore(%5 : memref<!tpu.dma_semaphore, #tpu.memory_space<semaphore_mem>>)
    %c3_i32 = arith.constant 3 : i32
    %6 = tpu.memref_slice %arg17[%c3_i32] : memref<6x!tpu.dma_semaphore, #tpu.memory_space<semaphore_mem>> -> memref<1x!tpu.dma_semaphore, #tpu.memory_space<semaphore_mem>>
    %7 = tpu.memref_squeeze %6 : memref<1x!tpu.dma_semaphore, #tpu.memory_space<semaphore_mem>> -> memref<!tpu.dma_semaphore, #tpu.memory_space<semaphore_mem>>
    tpu.enqueue_dma source(%arg7 : memref<1x128xf32, #tpu.memory_space<any>>) target(%arg14 : memref<1x128xf32, #tpu.memory_space<vmem>>) target_semaphore(%7 : memref<!tpu.dma_semaphore, #tpu.memory_space<semaphore_mem>>)
    %c4_i32 = arith.constant 4 : i32
    %8 = tpu.memref_slice %arg17[%c4_i32] : memref<6x!tpu.dma_semaphore, #tpu.memory_space<semaphore_mem>> -> memref<1x!tpu.dma_semaphore, #tpu.memory_space<semaphore_mem>>
    %9 = tpu.memref_squeeze %8 : memref<1x!tpu.dma_semaphore, #tpu.memory_space<semaphore_mem>> -> memref<!tpu.dma_semaphore, #tpu.memory_space<semaphore_mem>>
    tpu.enqueue_dma source(%arg8 : memref<128x8xbf16, #tpu.memory_space<any>>) target(%arg15 : memref<128x8xbf16, #tpu.memory_space<vmem>>) target_semaphore(%9 : memref<!tpu.dma_semaphore, #tpu.memory_space<semaphore_mem>>)
    %c5_i32 = arith.constant 5 : i32
    %10 = tpu.memref_slice %arg17[%c5_i32] : memref<6x!tpu.dma_semaphore, #tpu.memory_space<semaphore_mem>> -> memref<1x!tpu.dma_semaphore, #tpu.memory_space<semaphore_mem>>
    %11 = tpu.memref_squeeze %10 : memref<1x!tpu.dma_semaphore, #tpu.memory_space<semaphore_mem>> -> memref<!tpu.dma_semaphore, #tpu.memory_space<semaphore_mem>>
    tpu.enqueue_dma source(%arg9 : memref<1x8xf32, #tpu.memory_space<any>>) target(%arg16 : memref<1x8xf32, #tpu.memory_space<vmem>>) target_semaphore(%11 : memref<!tpu.dma_semaphore, #tpu.memory_space<semaphore_mem>>)
    %c0 = arith.constant 0 : index
    %c0_0 = arith.constant 0 : index
    %12 = vector.load %arg1[%c0, %c0_0] : memref<2x128xf32, #tpu.memory_space<vmem>>, vector<2x128xf32>
    %13 = arith.truncf %12 : vector<2x128xf32> to vector<2x128xbf16>
    %c0_1 = arith.constant 0 : index
    %c0_2 = arith.constant 0 : index
    %14 = vector.load %arg2[%c0_1, %c0_2] : memref<128x1024xbf16, #tpu.memory_space<vmem>>, vector<128x1024xbf16>
    %cst = arith.constant dense<0.000000e+00> : vector<2x1024xf32>
    %15 = tpu.matmul %13, %14, %cst {dimension_numbers = #tpu.dot_dimension_numbers<[1], [0], [0], [1], [0, 0, 1, 1], [], []>} : vector<2x128xbf16>, vector<128x1024xbf16>, vector<2x1024xf32> -> vector<2x1024xf32>
    %c0_3 = arith.constant 0 : index
    %c0_4 = arith.constant 0 : index
    %16 = vector.load %arg3[%c0_3, %c0_4] : memref<1x1024xf32, #tpu.memory_space<vmem>>, vector<1x1024xf32>
    %17 = vector.broadcast %16 : vector<1x1024xf32> to vector<2x1024xf32>
    %18 = arith.addf %15, %17 : vector<2x1024xf32>
    %cst_5 = arith.constant 0.000000e+00 : f32
    %19 = vector.broadcast %cst_5 : f32 to vector<2x1024xf32>
    %20 = arith.maximumf %18, %19 : vector<2x1024xf32>
    %21 = arith.truncf %20 : vector<2x1024xf32> to vector<2x1024xbf16>
    %c0_i32_6 = arith.constant 0 : i32
    %22 = tpu.memref_slice %arg17[%c0_i32_6] : memref<6x!tpu.dma_semaphore, #tpu.memory_space<semaphore_mem>> -> memref<1x!tpu.dma_semaphore, #tpu.memory_space<semaphore_mem>>
    %23 = tpu.memref_squeeze %22 : memref<1x!tpu.dma_semaphore, #tpu.memory_space<semaphore_mem>> -> memref<!tpu.dma_semaphore, #tpu.memory_space<semaphore_mem>>
    tpu.wait_dma2 semaphore(%23 : memref<!tpu.dma_semaphore, #tpu.memory_space<semaphore_mem>>) src(%arg4 : memref<1024x512xbf16, #tpu.memory_space<any>>) dst(%arg11 : memref<1024x512xbf16, #tpu.memory_space<vmem>>)
    %c1_i32_7 = arith.constant 1 : i32
    %24 = tpu.memref_slice %arg17[%c1_i32_7] : memref<6x!tpu.dma_semaphore, #tpu.memory_space<semaphore_mem>> -> memref<1x!tpu.dma_semaphore, #tpu.memory_space<semaphore_mem>>
    %25 = tpu.memref_squeeze %24 : memref<1x!tpu.dma_semaphore, #tpu.memory_space<semaphore_mem>> -> memref<!tpu.dma_semaphore, #tpu.memory_space<semaphore_mem>>
    tpu.wait_dma2 semaphore(%25 : memref<!tpu.dma_semaphore, #tpu.memory_space<semaphore_mem>>) src(%arg5 : memref<1x512xf32, #tpu.memory_space<any>>) dst(%arg12 : memref<1x512xf32, #tpu.memory_space<vmem>>)
    %c0_8 = arith.constant 0 : index
    %c0_9 = arith.constant 0 : index
    %26 = vector.load %arg11[%c0_8, %c0_9] : memref<1024x512xbf16, #tpu.memory_space<vmem>>, vector<1024x512xbf16>
    %cst_10 = arith.constant dense<0.000000e+00> : vector<2x512xf32>
    %27 = tpu.matmul %21, %26, %cst_10 {dimension_numbers = #tpu.dot_dimension_numbers<[1], [0], [0], [1], [0, 0, 1, 1], [], []>} : vector<2x1024xbf16>, vector<1024x512xbf16>, vector<2x512xf32> -> vector<2x512xf32>
    %c0_11 = arith.constant 0 : index
    %c0_12 = arith.constant 0 : index
    %28 = vector.load %arg12[%c0_11, %c0_12] : memref<1x512xf32, #tpu.memory_space<vmem>>, vector<1x512xf32>
    %29 = vector.broadcast %28 : vector<1x512xf32> to vector<2x512xf32>
    %30 = arith.addf %27, %29 : vector<2x512xf32>
    %cst_13 = arith.constant 0.000000e+00 : f32
    %31 = vector.broadcast %cst_13 : f32 to vector<2x512xf32>
    %32 = arith.maximumf %30, %31 : vector<2x512xf32>
    %33 = arith.truncf %32 : vector<2x512xf32> to vector<2x512xbf16>
    %c2_i32_14 = arith.constant 2 : i32
    %34 = tpu.memref_slice %arg17[%c2_i32_14] : memref<6x!tpu.dma_semaphore, #tpu.memory_space<semaphore_mem>> -> memref<1x!tpu.dma_semaphore, #tpu.memory_space<semaphore_mem>>
    %35 = tpu.memref_squeeze %34 : memref<1x!tpu.dma_semaphore, #tpu.memory_space<semaphore_mem>> -> memref<!tpu.dma_semaphore, #tpu.memory_space<semaphore_mem>>
    tpu.wait_dma2 semaphore(%35 : memref<!tpu.dma_semaphore, #tpu.memory_space<semaphore_mem>>) src(%arg6 : memref<512x128xbf16, #tpu.memory_space<any>>) dst(%arg13 : memref<512x128xbf16, #tpu.memory_space<vmem>>)
    %c3_i32_15 = arith.constant 3 : i32
    %36 = tpu.memref_slice %arg17[%c3_i32_15] : memref<6x!tpu.dma_semaphore, #tpu.memory_space<semaphore_mem>> -> memref<1x!tpu.dma_semaphore, #tpu.memory_space<semaphore_mem>>
    %37 = tpu.memref_squeeze %36 : memref<1x!tpu.dma_semaphore, #tpu.memory_space<semaphore_mem>> -> memref<!tpu.dma_semaphore, #tpu.memory_space<semaphore_mem>>
    tpu.wait_dma2 semaphore(%37 : memref<!tpu.dma_semaphore, #tpu.memory_space<semaphore_mem>>) src(%arg7 : memref<1x128xf32, #tpu.memory_space<any>>) dst(%arg14 : memref<1x128xf32, #tpu.memory_space<vmem>>)
    %c0_16 = arith.constant 0 : index
    %c0_17 = arith.constant 0 : index
    %38 = vector.load %arg13[%c0_16, %c0_17] : memref<512x128xbf16, #tpu.memory_space<vmem>>, vector<512x128xbf16>
    %cst_18 = arith.constant dense<0.000000e+00> : vector<2x128xf32>
    %39 = tpu.matmul %33, %38, %cst_18 {dimension_numbers = #tpu.dot_dimension_numbers<[1], [0], [0], [1], [0, 0, 1, 1], [], []>} : vector<2x512xbf16>, vector<512x128xbf16>, vector<2x128xf32> -> vector<2x128xf32>
    %c0_19 = arith.constant 0 : index
    %c0_20 = arith.constant 0 : index
    %40 = vector.load %arg14[%c0_19, %c0_20] : memref<1x128xf32, #tpu.memory_space<vmem>>, vector<1x128xf32>
    %41 = vector.broadcast %40 : vector<1x128xf32> to vector<2x128xf32>
    %42 = arith.addf %39, %41 : vector<2x128xf32>
    %cst_21 = arith.constant 0.000000e+00 : f32
    %43 = vector.broadcast %cst_21 : f32 to vector<2x128xf32>
    %44 = arith.maximumf %42, %43 : vector<2x128xf32>
    %45 = arith.truncf %44 : vector<2x128xf32> to vector<2x128xbf16>
    %c4_i32_22 = arith.constant 4 : i32
    %46 = tpu.memref_slice %arg17[%c4_i32_22] : memref<6x!tpu.dma_semaphore, #tpu.memory_space<semaphore_mem>> -> memref<1x!tpu.dma_semaphore, #tpu.memory_space<semaphore_mem>>
    %47 = tpu.memref_squeeze %46 : memref<1x!tpu.dma_semaphore, #tpu.memory_space<semaphore_mem>> -> memref<!tpu.dma_semaphore, #tpu.memory_space<semaphore_mem>>
    tpu.wait_dma2 semaphore(%47 : memref<!tpu.dma_semaphore, #tpu.memory_space<semaphore_mem>>) src(%arg8 : memref<128x8xbf16, #tpu.memory_space<any>>) dst(%arg15 : memref<128x8xbf16, #tpu.memory_space<vmem>>)
    %c5_i32_23 = arith.constant 5 : i32
    %48 = tpu.memref_slice %arg17[%c5_i32_23] : memref<6x!tpu.dma_semaphore, #tpu.memory_space<semaphore_mem>> -> memref<1x!tpu.dma_semaphore, #tpu.memory_space<semaphore_mem>>
    %49 = tpu.memref_squeeze %48 : memref<1x!tpu.dma_semaphore, #tpu.memory_space<semaphore_mem>> -> memref<!tpu.dma_semaphore, #tpu.memory_space<semaphore_mem>>
    tpu.wait_dma2 semaphore(%49 : memref<!tpu.dma_semaphore, #tpu.memory_space<semaphore_mem>>) src(%arg9 : memref<1x8xf32, #tpu.memory_space<any>>) dst(%arg16 : memref<1x8xf32, #tpu.memory_space<vmem>>)
    %c0_24 = arith.constant 0 : index
    %c0_25 = arith.constant 0 : index
    %50 = vector.load %arg15[%c0_24, %c0_25] : memref<128x8xbf16, #tpu.memory_space<vmem>>, vector<128x8xbf16>
    %cst_26 = arith.constant dense<0.000000e+00> : vector<2x8xf32>
    %51 = tpu.matmul %45, %50, %cst_26 {dimension_numbers = #tpu.dot_dimension_numbers<[1], [0], [0], [1], [0, 0, 1, 1], [], []>} : vector<2x128xbf16>, vector<128x8xbf16>, vector<2x8xf32> -> vector<2x8xf32>
    %c0_27 = arith.constant 0 : index
    %c0_28 = arith.constant 0 : index
    %52 = vector.load %arg16[%c0_27, %c0_28] : memref<1x8xf32, #tpu.memory_space<vmem>>, vector<1x8xf32>
    %53 = vector.broadcast %52 : vector<1x8xf32> to vector<2x8xf32>
    %54 = arith.addf %51, %53 : vector<2x8xf32>
    %c0_29 = arith.constant 0 : index
    %c0_30 = arith.constant 0 : index
    %55 = vector.load %arg10[%c0_29, %c0_30] : memref<2x8xf32, #tpu.memory_space<vmem>>, vector<2x8xf32>
    tpu.vector_store %arg10[%c0_29, %c0_30], %54 {strides = array<i32>} : memref<2x8xf32, #tpu.memory_space<vmem>>, vector<2x8xf32>,
    return
  }
  func.func @transform_0(%arg0: i32) -> (i32, i32) {
    %c0_i32 = arith.constant 0 : i32
    %c0_i32_0 = arith.constant 0 : i32
    %c0_i32_1 = arith.constant 0 : i32
    return %c0_i32, %c0_i32_0 : i32, i32
  }
  func.func @transform_1(%arg0: i32) -> (i32, i32) {
    %c0_i32 = arith.constant 0 : i32
    %c0_i32_0 = arith.constant 0 : i32
    %c0_i32_1 = arith.constant 0 : i32
    return %c0_i32, %c0_i32_0 : i32, i32
  }
  func.func @transform_2(%arg0: i32) -> (i32, i32) {
    %c0_i32 = arith.constant 0 : i32
    %c0_i32_0 = arith.constant 0 : i32
    %c0_i32_1 = arith.constant 0 : i32
    return %c0_i32, %c0_i32_0 : i32, i32
  }
  func.func @transform_9(%arg0: i32) -> (i32, i32) {
    %c0_i32 = arith.constant 0 : i32
    %c0_i32_0 = arith.constant 0 : i32
    %c0_i32_1 = arith.constant 0 : i32
    return %c0_i32, %c0_i32_0 : i32, i32
  }
}

</mosaic_0001>

<llo_original>
// kernel: tpu_custom_call.1
$region0: #{tpu_custom_call.1}
  #allocation0 [shape = 'u32[]', space=smem, size = 0x4, offset = 0x4, fixed_abs, tag = 'smem constant byte address 0x4 - core index']
  #allocation1 [shape = 'u32[144,128]{1,0:T(1,128)}', space=vmem, size = 0x12000, scoped, tag = 'internal scratch']
  #allocation2 [shape = 'bf16[1024,512]{1,0:T(16,128)(2,1)}', space=vmem, size = 0x100000, scoped, tag = 'scratch operand']
  #allocation3 [shape = 'f32[1,512]{1,0:T(1,128)}', space=vmem, size = 0x800, scoped, tag = 'scratch operand']
  #allocation4 [shape = 'bf16[512,128]{1,0:T(16,128)(2,1)}', space=vmem, size = 0x20000, scoped, tag = 'scratch operand']
  #allocation5 [shape = 'f32[1,128]{1,0:T(1,128)}', space=vmem, size = 0x200, scoped, tag = 'scratch operand']
  #allocation6 [shape = 'bf16[128,8]{1,0:T(16,128)(2,1)}', space=vmem, size = 0x8000, scoped, tag = 'scratch operand']
  #allocation7 [shape = 'f32[1,8]{1,0:T(1,128)}', space=vmem, size = 0x200, scoped, tag = 'scratch operand']
  #allocation8 [shape = 's32[6]{0}', space=sflag, size = 0x18, scoped, tag = 'scratch operand']
  #allocation13 [shape = 's32[]', space=sflag, size = 0x4, offset = 0, fixed_abs, tag = 'sflag constant byte address 0x0 - dummy sync flag']
  #allocation15 [shape = 's32[]', space=sflag, size = 0x4, offset = 0, fixed_abs, tag = 'sflag constant byte address 0x0 - dummy sync flag']
  #allocation16 [shape = 's32[]', space=sflag, size = 0x4, offset = 0, fixed_abs, tag = 'sflag constant byte address 0x0 - dummy sync flag']
  #allocation17 [shape = 's32[]', space=sflag, size = 0x4, offset = 0, fixed_abs, tag = 'sflag constant byte address 0x0 - dummy sync flag']
  #allocation18 [shape = 'u32[]', space=smem, size = 0x4, offset = 0x44, fixed_abs, tag = 'smem constant byte address 0x44 - assertion arg 0']
  #allocation19 [shape = 'u32[]', space=smem, size = 0x4, offset = 0x48, fixed_abs, tag = 'smem constant byte address 0x48 - assertion arg 1']
  #allocation20 [shape = 's32[]', space=sflag, size = 0x4, offset = 0, fixed_abs, tag = 'sflag constant byte address 0x0 - dummy sync flag']
  #allocation21 [shape = 's32[]', space=sflag, size = 0x4, offset = 0, fixed_abs, tag = 'sflag constant byte address 0x0 - dummy sync flag']
  #allocation22 [shape = 's32[]', space=sflag, size = 0x4, offset = 0, fixed_abs, tag = 'sflag constant byte address 0x0 - dummy sync flag']
  %s0 = inlined_call_operand.vmem [shape: f32[2,128], index: 0, kind: input, shape index: {}]
  %s1 = inlined_call_operand.hbm [shape: bf16[128,1024], index: 1, kind: input, shape index: {}]
  %s2 = inlined_call_operand.vmem [shape: f32[1,1024], index: 2, kind: input, shape index: {}]
  %s3 = inlined_call_operand.hbm [shape: bf16[1024,512], index: 3, kind: input, shape index: {}]
  %s4 = inlined_call_operand.vmem [shape: f32[1,512], index: 4, kind: input, shape index: {}]
  %s5 = inlined_call_operand.hbm [shape: bf16[512,128], index: 5, kind: input, shape index: {}]
  %s6 = inlined_call_operand.vmem [shape: f32[1,128], index: 6, kind: input, shape index: {}]
  %s7 = inlined_call_operand.vmem [shape: bf16[128,8], index: 7, kind: input, shape index: {}]
  %s8 = inlined_call_operand.vmem [shape: f32[1,8], index: 8, kind: input, shape index: {}]
  %s9 = inlined_call_operand.hbm [shape: f32[2,8], index: 9, kind: output, shape index: {}]
  %s10 = sld [smem:[#allocation0]]
  $region154: #{tpu_custom_call.1} parent=0
    _
  %s12 = ssub.s32 1, %s10
  %s13 = scalar_select 0, %s12, %s10
  $region1: #{tpu_custom_call.1} parent=0
    #allocation9 [shape = 'u8[262144]{0}', space=vmem, size = 0x40000, scoped, tag = 'input window, operand 1, single buffered']
    #allocation10 [shape = 's32[1]{0}', space=sflag, size = 0x4, scoped, tag = 'scoped memory for tpu_custom_call.1']
    #allocation11 [shape = 's32[1]{0}', space=sflag, size = 0x4, scoped, tag = 'scoped memory for tpu_custom_call.1']
    #allocation12 [shape = 'u8[1024]{0}', space=vmem, size = 0x400, scoped, tag = 'output window, operand 0, single buffered']
    #allocation14 [shape = 'u32[9]{0}', space=smem, size = 0x24, scoped, tag = 'DMA stride descriptor']
    %14 = vsyncpa [#allocation10], 0
    %15 = vsyncpa [#allocation11], 0
    // Predicated region
    $region2: #{tpu_custom_call.1} parent=1 // pred_check
      _
    $region3: #{tpu_custom_call.1} parent=1 // pred_check_branch
      %17 = sbr.rel (0) target = $region5
    $region4: #{tpu_custom_call.1} parent=1 // pred_region
      _
    $region5: #{tpu_custom_call.1} parent=1 // pred_fallthru
      _
    // Predicated region
    $region6: #{tpu_custom_call.1} parent=1 // pred_check
      _
    $region7: #{tpu_custom_call.1} parent=1 // pred_check_branch
      %19 = sbr.rel (0) target = $region9
    $region8: #{tpu_custom_call.1} parent=1 // pred_region
      %s21 = ssub.s32 8192, 8192
      %22 = vsyncadd [#allocation10], %s21
      %s23 = sshll.u32 [#allocation9], 4
      %s24 = int_to_ptr.vmem [resolvable:$true] %s23
      %29 = dma.hbm_to_vmem [thread:$0]  %s1, 8192, %s24, [#allocation10], 512, 512, 32
    $region9: #{tpu_custom_call.1} parent=1 // pred_fallthru
      _
    // Predicated region
    $region10: #{tpu_custom_call.1} parent=1 // pred_check
      _
    $region11: #{tpu_custom_call.1} parent=1 // pred_check_branch
      %31 = sbr.rel (0) target = $region13
    $region12: #{tpu_custom_call.1} parent=1 // pred_region
      _
    $region13: #{tpu_custom_call.1} parent=1 // pred_fallthru
      _
    // Predicated region
    $region14: #{tpu_custom_call.1} parent=1 // pred_check
      _
    $region15: #{tpu_custom_call.1} parent=1 // pred_check_branch
      %33 = sbr.rel (0) target = $region17
    $region16: #{tpu_custom_call.1} parent=1 // pred_region
      %34 = dma.done [#allocation10], 8192
    $region17: #{tpu_custom_call.1} parent=1 // pred_fallthru
      _
    %s37 = sshll.u32 1, 14
    %s38 = sxor.u32 4294967295, %s37
    %s40 = sld [smem:[#allocation0]]
    %s41 = sadd.s32 2, %s40
    %s43 = sshll.u32 7, 26
    %s44 = sxor.u32 4294967295, %s43
    %s45 = sand.u32 0, %s44
    %s46 = sshll.u32 %s41, 26
    %s47 = sor.u32 %s45, %s46
    %s48 = sshll.u32 [#allocation2], 4
    %s49 = int_to_ptr.vmem [resolvable:$true] %s48
    %52 = sst [smem:[#allocation14]] 512
    %s53 = scalar_lea.smem [#allocation14], 1
    %54 = sst [smem:[%s53]] 512
    %s55 = scalar_lea.smem [#allocation14], 2
    %56 = sst [smem:[%s55]] 4
    %s57 = scalar_lea.smem [#allocation14], 3
    %58 = sst [smem:[%s57]] 64
    %s59 = scalar_lea.smem [#allocation14], 4
    %60 = sst [smem:[%s59]] 128
    %s61 = scalar_lea.smem [#allocation14], 5
    %62 = sst [smem:[%s61]] 2
    %s63 = scalar_lea.smem [#allocation14], 6
    %64 = sst [smem:[%s63]] 256
    %s65 = scalar_lea.smem [#allocation14], 7
    %66 = sst [smem:[%s65]] 64
    %s67 = scalar_lea.smem [#allocation14], 8
    %68 = sst [smem:[%s67]] 4
    %70 = dma.general %s3, 32768, %s49, [#allocation8], [#allocation13], [#allocation14], %s47, 0
    %s71 = scalar_lea.sflag [#allocation8], 1
    %p73 = scmp.lt.u32.totalorder 4, 8
    %p74 = pneg %p73
    // Predicated region
    $region18: #{tpu_custom_call.1} parent=1 // pred_check
      _
    $region19: #{tpu_custom_call.1} parent=1 // pred_check_branch
      %76 = sbr.rel (%p73) target = $region21
    $region20: #{tpu_custom_call.1} parent=1 // pred_region
      %s91 = sand.u32 4, 7
      %p92 = scmp.eq.s32.totalorder %s91, 0
      %p93 = pneg %p92
      // Predicated region
      $region33: #{tpu_custom_call.1} parent=20 // pred_check
        _
      $region34: #{tpu_custom_call.1} parent=20 // pred_check_branch
        %95 = sbr.rel (%p92) target = $region36
      $region35: #{tpu_custom_call.1} parent=20 // pred_region
        %s96 = sand.u32 4, 7
        %s97 = ssub.s32 4, %s96
        %s98 = scalar_lea.vmem %s4, %s97
        %s99 = ssub.s32 4, %s96
        %s100 = scalar_lea.vmem [#allocation3], %s99
        %s101 = sshllo.u32 0, %s96
        loop: start=0, step=1, limit=1
        $region37: #{tpu_custom_call.1} parent=35 // loop_pre_header
          _
        $region38: #{tpu_custom_call.1} parent=35 // loop_header
          %s103 = sphi 0, %s107
          %p104 = scmp.ge.s32.totalorder %s103, 1
          %s108 = sphi %s98, %s98
          %s109 = sphi %s100, %s100
        $region39: #{tpu_custom_call.1} parent=35 // loop_header_branch
          %106 = sbr.rel (%p104) target = $region43
        $region40: #{tpu_custom_call.1} parent=35 // loop_body
          %v110 = vld [vmem:[%s108] sm:%s101]
          %111 = vst [vmem:[%s109] sm:%s101] %v110
        $region41: #{tpu_custom_call.1} parent=35 // loop_footer
          %s107 = sadd.s32 1, %s103
        $region42: #{tpu_custom_call.1} parent=35 // loop_footer_branch
          %102 = sbr.rel target = $region38
        $region43: #{tpu_custom_call.1} parent=35 // loop_exit
          _
      $region36: #{tpu_custom_call.1} parent=20 // pred_fallthru
        _
    $region21: #{tpu_custom_call.1} parent=1 // pred_fallthru
      _
    // Predicated region
    $region22: #{tpu_custom_call.1} parent=1 // pred_check
      %p77 = pneg %p73
    $region23: #{tpu_custom_call.1} parent=1 // pred_check_branch
      %79 = sbr.rel (%p77) target = $region25
    $region24: #{tpu_custom_call.1} parent=1 // pred_region
      %s80 = sshllo.u32 0, 4
      loop: start=0, step=1, limit=1
      $region26: #{tpu_custom_call.1} parent=24 // loop_pre_header
        _
      $region27: #{tpu_custom_call.1} parent=24 // loop_header
        %s82 = sphi 0, %s86
        %p83 = scmp.ge.s32.totalorder %s82, 1
        %s87 = sphi %s4, %s4
        %s88 = sphi [#allocation3], [#allocation3]
      $region28: #{tpu_custom_call.1} parent=24 // loop_header_branch
        %85 = sbr.rel (%p83) target = $region32
      $region29: #{tpu_custom_call.1} parent=24 // loop_body
        %v89 = vld [vmem:[%s87] sm:%s80]
        %90 = vst [vmem:[%s88] sm:%s80] %v89
      $region30: #{tpu_custom_call.1} parent=24 // loop_footer
        %s86 = sadd.s32 1, %s82
      $region31: #{tpu_custom_call.1} parent=24 // loop_footer_branch
        %81 = sbr.rel target = $region27
      $region32: #{tpu_custom_call.1} parent=24 // loop_exit
        _
    $region25: #{tpu_custom_call.1} parent=1 // pred_fallthru
      _
    // Predicated region
    $region44: #{tpu_custom_call.1} parent=1 // pred_check
      _
    $region45: #{tpu_custom_call.1} parent=1 // pred_check_branch
      %114 = sbr.rel (0) target = $region47
    $region46: #{tpu_custom_call.1} parent=1 // pred_region
      %115 = vsyncadd %s71, 64
    $region47: #{tpu_custom_call.1} parent=1 // pred_fallthru
      _
    %s116 = scalar_lea.sflag [#allocation8], 2
    // Predicated region
    $region48: #{tpu_custom_call.1} parent=1 // pred_check
      _
    $region49: #{tpu_custom_call.1} parent=1 // pred_check_branch
      %118 = sbr.rel target = $region51
    $region50: #{tpu_custom_call.1} parent=1 // pred_region
      %119 = sst [smem:[#allocation18]] [#allocation17]
      %120 = sst [smem:[#allocation19]] [#allocation16]
    $region51: #{tpu_custom_call.1} parent=1 // pred_fallthru
      _
    %122 = shalt.err (0)
    %s124 = sshll.u32 [#allocation4], 4
    %s125 = int_to_ptr.vmem [resolvable:$true] %s124
    %127 = dma.hbm_to_vmem [thread:$0]  %s5, 4096, %s125, %s116
    %s128 = scalar_lea.sflag [#allocation8], 3
    %p130 = scmp.lt.u32.totalorder 1, 8
    %p131 = pneg %p130
    // Predicated region
    $region52: #{tpu_custom_call.1} parent=1 // pred_check
      _
    $region53: #{tpu_custom_call.1} parent=1 // pred_check_branch
      %133 = sbr.rel (%p130) target = $region55
    $region54: #{tpu_custom_call.1} parent=1 // pred_region
      %s148 = sand.u32 1, 7
      %p149 = scmp.eq.s32.totalorder %s148, 0
      %p150 = pneg %p149
      // Predicated region
      $region67: #{tpu_custom_call.1} parent=54 // pred_check
        _
      $region68: #{tpu_custom_call.1} parent=54 // pred_check_branch
        %152 = sbr.rel (%p149) target = $region70
      $region69: #{tpu_custom_call.1} parent=54 // pred_region
        %s153 = sand.u32 1, 7
        %s154 = ssub.s32 1, %s153
        %s155 = scalar_lea.vmem %s6, %s154
        %s156 = ssub.s32 1, %s153
        %s157 = scalar_lea.vmem [#allocation5], %s156
        %s158 = sshllo.u32 0, %s153
        loop: start=0, step=1, limit=1
        $region71: #{tpu_custom_call.1} parent=69 // loop_pre_header
          _
        $region72: #{tpu_custom_call.1} parent=69 // loop_header
          %s160 = sphi 0, %s164
          %p161 = scmp.ge.s32.totalorder %s160, 1
          %s165 = sphi %s155, %s155
          %s166 = sphi %s157, %s157
        $region73: #{tpu_custom_call.1} parent=69 // loop_header_branch
          %163 = sbr.rel (%p161) target = $region77
        $region74: #{tpu_custom_call.1} parent=69 // loop_body
          %v167 = vld [vmem:[%s165] sm:%s158]
          %168 = vst [vmem:[%s166] sm:%s158] %v167
        $region75: #{tpu_custom_call.1} parent=69 // loop_footer
          %s164 = sadd.s32 1, %s160
        $region76: #{tpu_custom_call.1} parent=69 // loop_footer_branch
          %159 = sbr.rel target = $region72
        $region77: #{tpu_custom_call.1} parent=69 // loop_exit
          _
      $region70: #{tpu_custom_call.1} parent=54 // pred_fallthru
        _
    $region55: #{tpu_custom_call.1} parent=1 // pred_fallthru
      _
    // Predicated region
    $region56: #{tpu_custom_call.1} parent=1 // pred_check
      %p134 = pneg %p130
    $region57: #{tpu_custom_call.1} parent=1 // pred_check_branch
      %136 = sbr.rel (%p134) target = $region59
    $region58: #{tpu_custom_call.1} parent=1 // pred_region
      %s137 = sshllo.u32 0, 1
      loop: start=0, step=1, limit=1
      $region60: #{tpu_custom_call.1} parent=58 // loop_pre_header
        _
      $region61: #{tpu_custom_call.1} parent=58 // loop_header
        %s139 = sphi 0, %s143
        %p140 = scmp.ge.s32.totalorder %s139, 1
        %s144 = sphi %s6, %s6
        %s145 = sphi [#allocation5], [#allocation5]
      $region62: #{tpu_custom_call.1} parent=58 // loop_header_branch
        %142 = sbr.rel (%p140) target = $region66
      $region63: #{tpu_custom_call.1} parent=58 // loop_body
        %v146 = vld [vmem:[%s144] sm:%s137]
        %147 = vst [vmem:[%s145] sm:%s137] %v146
      $region64: #{tpu_custom_call.1} parent=58 // loop_footer
        %s143 = sadd.s32 1, %s139
      $region65: #{tpu_custom_call.1} parent=58 // loop_footer_branch
        %138 = sbr.rel target = $region61
      $region66: #{tpu_custom_call.1} parent=58 // loop_exit
        _
    $region59: #{tpu_custom_call.1} parent=1 // pred_fallthru
      _
    // Predicated region
    $region78: #{tpu_custom_call.1} parent=1 // pred_check
      _
    $region79: #{tpu_custom_call.1} parent=1 // pred_check_branch
      %171 = sbr.rel (0) target = $region81
    $region80: #{tpu_custom_call.1} parent=1 // pred_region
      %172 = vsyncadd %s128, 16
    $region81: #{tpu_custom_call.1} parent=1 // pred_fallthru
      _
    %s173 = scalar_lea.sflag [#allocation8], 4
    %p175 = scmp.lt.u32.totalorder 64, 8
    %p176 = pneg %p175
    // Predicated region
    $region82: #{tpu_custom_call.1} parent=1 // pred_check
      _
    $region83: #{tpu_custom_call.1} parent=1 // pred_check_branch
      %178 = sbr.rel (%p175) target = $region85
    $region84: #{tpu_custom_call.1} parent=1 // pred_region
      %s193 = sand.u32 64, 7
      %p194 = scmp.eq.s32.totalorder %s193, 0
      // Predicated region
      $region97: #{tpu_custom_call.1} parent=84 // pred_check
        %p195 = pneg %p194
      $region98: #{tpu_custom_call.1} parent=84 // pred_check_branch
        %197 = sbr.rel (%p195) target = $region100
      $region99: #{tpu_custom_call.1} parent=84 // pred_region
        loop: start=0, step=1, limit=1
        $region101: #{tpu_custom_call.1} parent=99 // loop_pre_header
          _
        $region102: #{tpu_custom_call.1} parent=99 // loop_header
          %s199 = sphi 0, %s203
          %p200 = scmp.ge.s32.totalorder %s199, 1
          %s204 = sphi %s7, %s7
          %s205 = sphi [#allocation6], [#allocation6]
        $region103: #{tpu_custom_call.1} parent=99 // loop_header_branch
          %202 = sbr.rel (%p200) target = $region107
        $region104: #{tpu_custom_call.1} parent=99 // loop_body
          %v206 = vld [vmem:[%s204] sm:$0xff]
          %207 = vst [vmem:[%s205] sm:$0xff] %v206
          %v208 = vld [vmem:[%s204 + $0x8] sm:$0xff]
          %209 = vst [vmem:[%s205 + $0x8] sm:$0xff] %v208
          %v210 = vld [vmem:[%s204 + $0x10] sm:$0xff]
          %211 = vst [vmem:[%s205 + $0x10] sm:$0xff] %v210
          %v212 = vld [vmem:[%s204 + $0x18] sm:$0xff]
          %213 = vst [vmem:[%s205 + $0x18] sm:$0xff] %v212
          %v214 = vld [vmem:[%s204 + $0x20] sm:$0xff]
          %215 = vst [vmem:[%s205 + $0x20] sm:$0xff] %v214
          %v216 = vld [vmem:[%s204 + $0x28] sm:$0xff]
          %217 = vst [vmem:[%s205 + $0x28] sm:$0xff] %v216
          %v218 = vld [vmem:[%s204 + $0x30] sm:$0xff]
          %219 = vst [vmem:[%s205 + $0x30] sm:$0xff] %v218
          %v220 = vld [vmem:[%s204 + $0x38] sm:$0xff]
          %221 = vst [vmem:[%s205 + $0x38] sm:$0xff] %v220
        $region105: #{tpu_custom_call.1} parent=99 // loop_footer
          %s203 = sadd.s32 1, %s199
        $region106: #{tpu_custom_call.1} parent=99 // loop_footer_branch
          %198 = sbr.rel target = $region102
        $region107: #{tpu_custom_call.1} parent=99 // loop_exit
          _
      $region100: #{tpu_custom_call.1} parent=84 // pred_fallthru
        _
      %p222 = pneg %p194
      // Predicated region
      $region108: #{tpu_custom_call.1} parent=84 // pred_check
        _
      $region109: #{tpu_custom_call.1} parent=84 // pred_check_branch
        %224 = sbr.rel (%p194) target = $region111
      $region110: #{tpu_custom_call.1} parent=84 // pred_region
        %s225 = sand.u32 64, 7
      $region111: #{tpu_custom_call.1} parent=84 // pred_fallthru
        _
    $region85: #{tpu_custom_call.1} parent=1 // pred_fallthru
      _
    // Predicated region
    $region86: #{tpu_custom_call.1} parent=1 // pred_check
      %p179 = pneg %p175
    $region87: #{tpu_custom_call.1} parent=1 // pred_check_branch
      %181 = sbr.rel (%p179) target = $region89
    $region88: #{tpu_custom_call.1} parent=1 // pred_region
      %s182 = sshllo.u32 0, 64
      loop: start=0, step=1, limit=1
      $region90: #{tpu_custom_call.1} parent=88 // loop_pre_header
        _
      $region91: #{tpu_custom_call.1} parent=88 // loop_header
        %s184 = sphi 0, %s188
        %p185 = scmp.ge.s32.totalorder %s184, 1
        %s189 = sphi %s7, %s7
        %s190 = sphi [#allocation6], [#allocation6]
      $region92: #{tpu_custom_call.1} parent=88 // loop_header_branch
        %187 = sbr.rel (%p185) target = $region96
      $region93: #{tpu_custom_call.1} parent=88 // loop_body
        %v191 = vld [vmem:[%s189] sm:%s182]
        %192 = vst [vmem:[%s190] sm:%s182] %v191
      $region94: #{tpu_custom_call.1} parent=88 // loop_footer
        %s188 = sadd.s32 1, %s184
      $region95: #{tpu_custom_call.1} parent=88 // loop_footer_branch
        %183 = sbr.rel target = $region91
      $region96: #{tpu_custom_call.1} parent=88 // loop_exit
        _
    $region89: #{tpu_custom_call.1} parent=1 // pred_fallthru
      _
    // Predicated region
    $region112: #{tpu_custom_call.1} parent=1 // pred_check
      _
    $region113: #{tpu_custom_call.1} parent=1 // pred_check_branch
      %228 = sbr.rel (0) target = $region115
    $region114: #{tpu_custom_call.1} parent=1 // pred_region
      %229 = vsyncadd %s173, 1024
    $region115: #{tpu_custom_call.1} parent=1 // pred_fallthru
      _
    %s230 = scalar_lea.sflag [#allocation8], 5
    %p232 = scmp.lt.u32.totalorder 1, 8
    %p233 = pneg %p232
    // Predicated region
    $region116: #{tpu_custom_call.1} parent=1 // pred_check
      _
    $region117: #{tpu_custom_call.1} parent=1 // pred_check_branch
      %235 = sbr.rel (%p232) target = $region119
    $region118: #{tpu_custom_call.1} parent=1 // pred_region
      %s250 = sand.u32 1, 7
      %p251 = scmp.eq.s32.totalorder %s250, 0
      %p252 = pneg %p251
      // Predicated region
      $region131: #{tpu_custom_call.1} parent=118 // pred_check
        _
      $region132: #{tpu_custom_call.1} parent=118 // pred_check_branch
        %254 = sbr.rel (%p251) target = $region134
      $region133: #{tpu_custom_call.1} parent=118 // pred_region
        %s255 = sand.u32 1, 7
        %s256 = ssub.s32 1, %s255
        %s257 = scalar_lea.vmem %s8, %s256
        %s258 = ssub.s32 1, %s255
        %s259 = scalar_lea.vmem [#allocation7], %s258
        %s260 = sshllo.u32 0, %s255
        loop: start=0, step=1, limit=1
        $region135: #{tpu_custom_call.1} parent=133 // loop_pre_header
          _
        $region136: #{tpu_custom_call.1} parent=133 // loop_header
          %s262 = sphi 0, %s266
          %p263 = scmp.ge.s32.totalorder %s262, 1
          %s267 = sphi %s257, %s257
          %s268 = sphi %s259, %s259
        $region137: #{tpu_custom_call.1} parent=133 // loop_header_branch
          %265 = sbr.rel (%p263) target = $region141
        $region138: #{tpu_custom_call.1} parent=133 // loop_body
          %v269 = vld [vmem:[%s267] sm:%s260]
          %270 = vst [vmem:[%s268] sm:%s260] %v269
        $region139: #{tpu_custom_call.1} parent=133 // loop_footer
          %s266 = sadd.s32 1, %s262
        $region140: #{tpu_custom_call.1} parent=133 // loop_footer_branch
          %261 = sbr.rel target = $region136
        $region141: #{tpu_custom_call.1} parent=133 // loop_exit
          _
      $region134: #{tpu_custom_call.1} parent=118 // pred_fallthru
        _
    $region119: #{tpu_custom_call.1} parent=1 // pred_fallthru
      _
    // Predicated region
    $region120: #{tpu_custom_call.1} parent=1 // pred_check
      %p236 = pneg %p232
    $region121: #{tpu_custom_call.1} parent=1 // pred_check_branch
      %238 = sbr.rel (%p236) target = $region123
    $region122: #{tpu_custom_call.1} parent=1 // pred_region
      %s239 = sshllo.u32 0, 1
      loop: start=0, step=1, limit=1
      $region124: #{tpu_custom_call.1} parent=122 // loop_pre_header
        _
      $region125: #{tpu_custom_call.1} parent=122 // loop_header
        %s241 = sphi 0, %s245
        %p242 = scmp.ge.s32.totalorder %s241, 1
        %s246 = sphi %s8, %s8
        %s247 = sphi [#allocation7], [#allocation7]
      $region126: #{tpu_custom_call.1} parent=122 // loop_header_branch
        %244 = sbr.rel (%p242) target = $region130
      $region127: #{tpu_custom_call.1} parent=122 // loop_body
        %v248 = vld [vmem:[%s246] sm:%s239]
        %249 = vst [vmem:[%s247] sm:%s239] %v248
      $region128: #{tpu_custom_call.1} parent=122 // loop_footer
        %s245 = sadd.s32 1, %s241
      $region129: #{tpu_custom_call.1} parent=122 // loop_footer_branch
        %240 = sbr.rel target = $region125
      $region130: #{tpu_custom_call.1} parent=122 // loop_exit
        _
    $region123: #{tpu_custom_call.1} parent=1 // pred_fallthru
      _
    // Predicated region
    $region142: #{tpu_custom_call.1} parent=1 // pred_check
      _
    $region143: #{tpu_custom_call.1} parent=1 // pred_check_branch
      %273 = sbr.rel (0) target = $region145
    $region144: #{tpu_custom_call.1} parent=1 // pred_region
      %274 = vsyncadd %s230, 16
    $region145: #{tpu_custom_call.1} parent=1 // pred_fallthru
      _
    %v275 = vld [vmem:[%s0] sm:$0x3]
    %v276 = vpack.c.bf16 %v275, %v275
    %v277 = vld [vmem:[#allocation9] sm:$0xff]
    %v278 = vld [vmem:[#allocation9 + $0x8] sm:$0xff]
    %v279 = vld [vmem:[#allocation9 + $0x10] sm:$0xff]
    %v280 = vld [vmem:[#allocation9 + $0x18] sm:$0xff]
    %v281 = vld [vmem:[#allocation9 + $0x20] sm:$0xff]
    %v282 = vld [vmem:[#allocation9 + $0x28] sm:$0xff]
    %v283 = vld [vmem:[#allocation9 + $0x30] sm:$0xff]
    %v284 = vld [vmem:[#allocation9 + $0x38] sm:$0xff]
    %v285 = vld [vmem:[#allocation9 + $0x40] sm:$0xff]
    %v286 = vld [vmem:[#allocation9 + $0x48] sm:$0xff]
    %v287 = vld [vmem:[#allocation9 + $0x50] sm:$0xff]
    %v288 = vld [vmem:[#allocation9 + $0x58] sm:$0xff]
    %v289 = vld [vmem:[#allocation9 + $0x60] sm:$0xff]
    %v290 = vld [vmem:[#allocation9 + $0x68] sm:$0xff]
    %v291 = vld [vmem:[#allocation9 + $0x70] sm:$0xff]
    %v292 = vld [vmem:[#allocation9 + $0x78] sm:$0xff]
    %v293 = vld [vmem:[#allocation9 + $0x80] sm:$0xff]
    %v294 = vld [vmem:[#allocation9 + $0x88] sm:$0xff]
    %v295 = vld [vmem:[#allocation9 + $0x90] sm:$0xff]
    %v296 = vld [vmem:[#allocation9 + $0x98] sm:$0xff]
    %v297 = vld [vmem:[#allocation9 + $0xa0] sm:$0xff]
    %v298 = vld [vmem:[#allocation9 + $0xa8] sm:$0xff]
    %v299 = vld [vmem:[#allocation9 + $0xb0] sm:$0xff]
    %v300 = vld [vmem:[#allocation9 + $0xb8] sm:$0xff]
    %v301 = vld [vmem:[#allocation9 + $0xc0] sm:$0xff]
    %v302 = vld [vmem:[#allocation9 + $0xc8] sm:$0xff]
    %v303 = vld [vmem:[#allocation9 + $0xd0] sm:$0xff]
    %v304 = vld [vmem:[#allocation9 + $0xd8] sm:$0xff]
    %v305 = vld [vmem:[#allocation9 + $0xe0] sm:$0xff]
    %v306 = vld [vmem:[#allocation9 + $0xe8] sm:$0xff]
    %v307 = vld [vmem:[#allocation9 + $0xf0] sm:$0xff]
    %v308 = vld [vmem:[#allocation9 + $0xf8] sm:$0xff]
    %v309 = vld [vmem:[#allocation9 + $0x100] sm:$0xff]
    %v310 = vld [vmem:[#allocation9 + $0x108] sm:$0xff]
    %v311 = vld [vmem:[#allocation9 + $0x110] sm:$0xff]
    %v312 = vld [vmem:[#allocation9 + $0x118] sm:$0xff]
    %v313 = vld [vmem:[#allocation9 + $0x120] sm:$0xff]
    %v314 = vld [vmem:[#allocation9 + $0x128] sm:$0xff]
    %v315 = vld [vmem:[#allocation9 + $0x130] sm:$0xff]
    %v316 = vld [vmem:[#allocation9 + $0x138] sm:$0xff]
    %v317 = vld [vmem:[#allocation9 + $0x140] sm:$0xff]
    %v318 = vld [vmem:[#allocation9 + $0x148] sm:$0xff]
    %v319 = vld [vmem:[#allocation9 + $0x150] sm:$0xff]
    %v320 = vld [vmem:[#allocation9 + $0x158] sm:$0xff]
    %v321 = vld [vmem:[#allocation9 + $0x160] sm:$0xff]
    %v322 = vld [vmem:[#allocation9 + $0x168] sm:$0xff]
    %v323 = vld [vmem:[#allocation9 + $0x170] sm:$0xff]
    %v324 = vld [vmem:[#allocation9 + $0x178] sm:$0xff]
    %v325 = vld [vmem:[#allocation9 + $0x180] sm:$0xff]
    %v326 = vld [vmem:[#allocation9 + $0x188] sm:$0xff]
    %v327 = vld [vmem:[#allocation9 + $0x190] sm:$0xff]
    %v328 = vld [vmem:[#allocation9 + $0x198] sm:$0xff]
    %v329 = vld [vmem:[#allocation9 + $0x1a0] sm:$0xff]
    %v330 = vld [vmem:[#allocation9 + $0x1a8] sm:$0xff]
    %v331 = vld [vmem:[#allocation9 + $0x1b0] sm:$0xff]
    %v332 = vld [vmem:[#allocation9 + $0x1b8] sm:$0xff]
    %v333 = vld [vmem:[#allocation9 + $0x1c0] sm:$0xff]
    %v334 = vld [vmem:[#allocation9 + $0x1c8] sm:$0xff]
    %v335 = vld [vmem:[#allocation9 + $0x1d0] sm:$0xff]
    %v336 = vld [vmem:[#allocation9 + $0x1d8] sm:$0xff]
    %v337 = vld [vmem:[#allocation9 + $0x1e0] sm:$0xff]
    %v338 = vld [vmem:[#allocation9 + $0x1e8] sm:$0xff]
    %v339 = vld [vmem:[#allocation9 + $0x1f0] sm:$0xff]
    %v340 = vld [vmem:[#allocation9 + $0x1f8] sm:$0xff]
    %v341 = vld [vmem:[%s2] sm:$0xff]
    %v343 = vlaneseq
    %v344 = vshrl.u32 %v343, 7
    %v345 = vsub.s32 0, %v344
    %v346 = vrot.slane %v341, %v345
    %v347 = vlaneseq
    %v348 = vshrl.u32 %v347, 7
    %v349 = vsub.s32 1, %v348
    %v350 = vrot.slane %v341, %v349
    %v351 = vlaneseq
    %v352 = vshrl.u32 %v351, 7
    %v353 = vsub.s32 2, %v352
    %v354 = vrot.slane %v341, %v353
    %v355 = vlaneseq
    %v356 = vshrl.u32 %v355, 7
    %v357 = vsub.s32 3, %v356
    %v358 = vrot.slane %v341, %v357
    %v359 = vlaneseq
    %v360 = vshrl.u32 %v359, 7
    %v361 = vsub.s32 4, %v360
    %v362 = vrot.slane %v341, %v361
    %v363 = vlaneseq
    %v364 = vshrl.u32 %v363, 7
    %v365 = vsub.s32 5, %v364
    %v366 = vrot.slane %v341, %v365
    %v367 = vlaneseq
    %v368 = vshrl.u32 %v367, 7
    %v369 = vsub.s32 6, %v368
    %v370 = vrot.slane %v341, %v369
    %v371 = vlaneseq
    %v372 = vshrl.u32 %v371, 7
    %v373 = vsub.s32 7, %v372
    %v374 = vrot.slane %v341, %v373
    %v447 = vunpack.c.l.b16 %v277
    %v448 = vunpack.c.h.b16 %v277
    %v449 = vunpack.c.l.b16 %v278
    %v450 = vunpack.c.h.b16 %v278
    %v451 = vunpack.c.l.b16 %v279
    %v452 = vunpack.c.h.b16 %v279
    %v453 = vunpack.c.l.b16 %v280
    %v454 = vunpack.c.h.b16 %v280
    %v455 = vunpack.c.l.b16 %v281
    %v456 = vunpack.c.h.b16 %v281
    %v457 = vunpack.c.l.b16 %v282
    %v458 = vunpack.c.h.b16 %v282
    %v459 = vunpack.c.l.b16 %v283
    %v460 = vunpack.c.h.b16 %v283
    %v461 = vunpack.c.l.b16 %v284
    %v462 = vunpack.c.h.b16 %v284
    %v463 = vunpack.c.l.b16 %v285
    %v464 = vunpack.c.h.b16 %v285
    %v465 = vunpack.c.l.b16 %v286
    %v466 = vunpack.c.h.b16 %v286
    %v467 = vunpack.c.l.b16 %v287
    %v468 = vunpack.c.h.b16 %v287
    %v469 = vunpack.c.l.b16 %v288
    %v470 = vunpack.c.h.b16 %v288
    %v471 = vunpack.c.l.b16 %v289
    %v472 = vunpack.c.h.b16 %v289
    %v473 = vunpack.c.l.b16 %v290
    %v474 = vunpack.c.h.b16 %v290
    %v475 = vunpack.c.l.b16 %v291
    %v476 = vunpack.c.h.b16 %v291
    %v477 = vunpack.c.l.b16 %v292
    %v478 = vunpack.c.h.b16 %v292
    %v479 = vunpack.c.l.b16 %v293
    %v480 = vunpack.c.h.b16 %v293
    %v481 = vunpack.c.l.b16 %v294
    %v482 = vunpack.c.h.b16 %v294
    %v483 = vunpack.c.l.b16 %v295
    %v484 = vunpack.c.h.b16 %v295
    %v485 = vunpack.c.l.b16 %v296
    %v486 = vunpack.c.h.b16 %v296
    %v487 = vunpack.c.l.b16 %v297
    %v488 = vunpack.c.h.b16 %v297
    %v489 = vunpack.c.l.b16 %v298
    %v490 = vunpack.c.h.b16 %v298
    %v491 = vunpack.c.l.b16 %v299
    %v492 = vunpack.c.h.b16 %v299
    %v493 = vunpack.c.l.b16 %v300
    %v494 = vunpack.c.h.b16 %v300
    %v495 = vunpack.c.l.b16 %v301
    %v496 = vunpack.c.h.b16 %v301
    %v497 = vunpack.c.l.b16 %v302
    %v498 = vunpack.c.h.b16 %v302
    %v499 = vunpack.c.l.b16 %v303
    %v500 = vunpack.c.h.b16 %v303
    %v501 = vunpack.c.l.b16 %v304
    %v502 = vunpack.c.h.b16 %v304
    %v503 = vunpack.c.l.b16 %v305
    %v504 = vunpack.c.h.b16 %v305
    %v505 = vunpack.c.l.b16 %v306
    %v506 = vunpack.c.h.b16 %v306
    %v507 = vunpack.c.l.b16 %v307
    %v508 = vunpack.c.h.b16 %v307
    %v509 = vunpack.c.l.b16 %v308
    %v510 = vunpack.c.h.b16 %v308
    %v511 = vunpack.c.l.b16 %v309
    %v512 = vunpack.c.h.b16 %v309
    %v513 = vunpack.c.l.b16 %v310
    %v514 = vunpack.c.h.b16 %v310
    %v515 = vunpack.c.l.b16 %v311
    %v516 = vunpack.c.h.b16 %v311
    %v517 = vunpack.c.l.b16 %v312
    %v518 = vunpack.c.h.b16 %v312
    %v519 = vunpack.c.l.b16 %v313
    %v520 = vunpack.c.h.b16 %v313
    %v521 = vunpack.c.l.b16 %v314
    %v522 = vunpack.c.h.b16 %v314
    %v523 = vunpack.c.l.b16 %v315
    %v524 = vunpack.c.h.b16 %v315
    %v525 = vunpack.c.l.b16 %v316
    %v526 = vunpack.c.h.b16 %v316
    %v527 = vunpack.c.l.b16 %v317
    %v528 = vunpack.c.h.b16 %v317
    %v529 = vunpack.c.l.b16 %v318
    %v530 = vunpack.c.h.b16 %v318
    %v531 = vunpack.c.l.b16 %v319
    %v532 = vunpack.c.h.b16 %v319
    %v533 = vunpack.c.l.b16 %v320
    %v534 = vunpack.c.h.b16 %v320
    %v535 = vunpack.c.l.b16 %v321
    %v536 = vunpack.c.h.b16 %v321
    %v537 = vunpack.c.l.b16 %v322
    %v538 = vunpack.c.h.b16 %v322
    %v539 = vunpack.c.l.b16 %v323
    %v540 = vunpack.c.h.b16 %v323
    %v541 = vunpack.c.l.b16 %v324
    %v542 = vunpack.c.h.b16 %v324
    %v543 = vunpack.c.l.b16 %v325
    %v544 = vunpack.c.h.b16 %v325
    %v545 = vunpack.c.l.b16 %v326
    %v546 = vunpack.c.h.b16 %v326
    %v547 = vunpack.c.l.b16 %v327
    %v548 = vunpack.c.h.b16 %v327
    %v549 = vunpack.c.l.b16 %v328
    %v550 = vunpack.c.h.b16 %v328
    %v551 = vunpack.c.l.b16 %v329
    %v552 = vunpack.c.h.b16 %v329
    %v553 = vunpack.c.l.b16 %v330
    %v554 = vunpack.c.h.b16 %v330
    %v555 = vunpack.c.l.b16 %v331
    %v556 = vunpack.c.h.b16 %v331
    %v557 = vunpack.c.l.b16 %v332
    %v558 = vunpack.c.h.b16 %v332
    %v559 = vunpack.c.l.b16 %v333
    %v560 = vunpack.c.h.b16 %v333
    %v561 = vunpack.c.l.b16 %v334
    %v562 = vunpack.c.h.b16 %v334
    %v563 = vunpack.c.l.b16 %v335
    %v564 = vunpack.c.h.b16 %v335
    %v565 = vunpack.c.l.b16 %v336
    %v566 = vunpack.c.h.b16 %v336
    %v567 = vunpack.c.l.b16 %v337
    %v568 = vunpack.c.h.b16 %v337
    %v569 = vunpack.c.l.b16 %v338
    %v570 = vunpack.c.h.b16 %v338
    %v571 = vunpack.c.l.b16 %v339
    %v572 = vunpack.c.h.b16 %v339
    %v573 = vunpack.c.l.b16 %v340
    %v574 = vunpack.c.h.b16 %v340
    %v575 = vpack.c.b16 %v455, %v447
    %v576 = vpack.c.b16 %v456, %v448
    %v577 = vpack.c.b16 %v457, %v449
    %v578 = vpack.c.b16 %v458, %v450
    %v579 = vpack.c.b16 %v459, %v451
    %v580 = vpack.c.b16 %v460, %v452
    %v581 = vpack.c.b16 %v461, %v453
    %v582 = vpack.c.b16 %v462, %v454
    %v583 = vpack.c.b16 %v471, %v463
    %v584 = vpack.c.b16 %v472, %v464
    %v585 = vpack.c.b16 %v473, %v465
    %v586 = vpack.c.b16 %v474, %v466
    %v587 = vpack.c.b16 %v475, %v467
    %v588 = vpack.c.b16 %v476, %v468
    %v589 = vpack.c.b16 %v477, %v469
    %v590 = vpack.c.b16 %v478, %v470
    %v591 = vpack.c.b16 %v487, %v479
    %v592 = vpack.c.b16 %v488, %v480
    %v593 = vpack.c.b16 %v489, %v481
    %v594 = vpack.c.b16 %v490, %v482
    %v595 = vpack.c.b16 %v491, %v483
    %v596 = vpack.c.b16 %v492, %v484
    %v597 = vpack.c.b16 %v493, %v485
    %v598 = vpack.c.b16 %v494, %v486
    %v599 = vpack.c.b16 %v503, %v495
    %v600 = vpack.c.b16 %v504, %v496
    %v601 = vpack.c.b16 %v505, %v497
    %v602 = vpack.c.b16 %v506, %v498
    %v603 = vpack.c.b16 %v507, %v499
    %v604 = vpack.c.b16 %v508, %v500
    %v605 = vpack.c.b16 %v509, %v501
    %v606 = vpack.c.b16 %v510, %v502
    %v607 = vpack.c.b16 %v519, %v511
    %v608 = vpack.c.b16 %v520, %v512
    %v609 = vpack.c.b16 %v521, %v513
    %v610 = vpack.c.b16 %v522, %v514
    %v611 = vpack.c.b16 %v523, %v515
    %v612 = vpack.c.b16 %v524, %v516
    %v613 = vpack.c.b16 %v525, %v517
    %v614 = vpack.c.b16 %v526, %v518
    %v615 = vpack.c.b16 %v535, %v527
    %v616 = vpack.c.b16 %v536, %v528
    %v617 = vpack.c.b16 %v537, %v529
    %v618 = vpack.c.b16 %v538, %v530
    %v619 = vpack.c.b16 %v539, %v531
    %v620 = vpack.c.b16 %v540, %v532
    %v621 = vpack.c.b16 %v541, %v533
    %v622 = vpack.c.b16 %v542, %v534
    %v623 = vpack.c.b16 %v551, %v543
    %v624 = vpack.c.b16 %v552, %v544
    %v625 = vpack.c.b16 %v553, %v545
    %v626 = vpack.c.b16 %v554, %v546
    %v627 = vpack.c.b16 %v555, %v547
    %v628 = vpack.c.b16 %v556, %v548
    %v629 = vpack.c.b16 %v557, %v549
    %v630 = vpack.c.b16 %v558, %v550
    %v631 = vpack.c.b16 %v567, %v559
    %v632 = vpack.c.b16 %v568, %v560
    %v633 = vpack.c.b16 %v569, %v561
    %v634 = vpack.c.b16 %v570, %v562
    %v635 = vpack.c.b16 %v571, %v563
    %v636 = vpack.c.b16 %v572, %v564
    %v637 = vpack.c.b16 %v573, %v565
    %v638 = vpack.c.b16 %v574, %v566
    %703 = vmatprep.subr.bf16.mxu0 %v576
    %704 = vmatpush1.bf16.msra.mxu0 %v575
    %705 = vmatprep.subr.bf16.mxu0 %v584
    %706 = vmatpush1.bf16.msra.mxu0 %v583
    %707 = vmatprep.subr.bf16.mxu0 %v592
    %708 = vmatpush1.bf16.msra.mxu0 %v591
    %709 = vmatprep.subr.bf16.mxu0 %v600
    %710 = vmatpush1.bf16.msra.mxu0 %v599
    %711 = vmatprep.subr.bf16.mxu0 %v608
    %712 = vmatpush1.bf16.msra.mxu0 %v607
    %713 = vmatprep.subr.bf16.mxu0 %v616
    %714 = vmatpush1.bf16.msra.mxu0 %v615
    %715 = vmatprep.subr.bf16.mxu0 %v624
    %716 = vmatpush1.bf16.msra.mxu0 %v623
    %717 = vmatprep.subr.bf16.mxu0 %v632
    %718 = vmatpush1.bf16.msra.mxu0 %v631
    %719 = vmatprep.subr.bf16.mxu0 0
    %720 = vmatpush1.bf16.msra.mxu0 0
    %721 = vmatprep.subr.bf16.mxu0 0
    %722 = vmatpush1.bf16.msra.mxu0 0
    %723 = vmatprep.subr.bf16.mxu0 0
    %724 = vmatpush1.bf16.msra.mxu0 0
    %725 = vmatprep.subr.bf16.mxu0 0
    %726 = vmatpush1.bf16.msra.mxu0 0
    %727 = vmatprep.subr.bf16.mxu0 0
    %728 = vmatpush1.bf16.msra.mxu0 0
    %729 = vmatprep.subr.bf16.mxu0 0
    %730 = vmatpush1.bf16.msra.mxu0 0
    %731 = vmatprep.subr.bf16.mxu0 0
    %732 = vmatpush1.bf16.msra.mxu0 0
    %733 = vmatprep.subr.bf16.mxu0 0
    %734 = vmatpush1.bf16.msra.mxu0 0
    %735 = vmatprep.mubr.bf16.mxu0 0
    %736 = vmatmul.mubr.bf16.gmra.mrb[0].mxu0 %v276
    %v737 = vpop.f32.mrb[0].mxu0
    %v738 = vadd.f32 %v346, %v737
    %v739 = vpop.f32.mrb[0].mxu0
    %v740 = vadd.f32 %v350, %v739
    %v741 = vpop.f32.mrb[0].mxu0
    %v742 = vpop.f32.mrb[0].mxu0
    %743 = vdwg.mxu0
    %744 = vmatprep.subr.bf16.mxu0 %v578
    %745 = vmatpush1.bf16.msra.mxu0 %v577
    %746 = vmatprep.subr.bf16.mxu0 %v586
    %747 = vmatpush1.bf16.msra.mxu0 %v585
    %748 = vmatprep.subr.bf16.mxu0 %v594
    %749 = vmatpush1.bf16.msra.mxu0 %v593
    %750 = vmatprep.subr.bf16.mxu0 %v602
    %751 = vmatpush1.bf16.msra.mxu0 %v601
    %752 = vmatprep.subr.bf16.mxu0 %v610
    %753 = vmatpush1.bf16.msra.mxu0 %v609
    %754 = vmatprep.subr.bf16.mxu0 %v618
    %755 = vmatpush1.bf16.msra.mxu0 %v617
    %756 = vmatprep.subr.bf16.mxu0 %v626
    %757 = vmatpush1.bf16.msra.mxu0 %v625
    %758 = vmatprep.subr.bf16.mxu0 %v634
    %759 = vmatpush1.bf16.msra.mxu0 %v633
    %760 = vmatprep.subr.bf16.mxu0 0
    %761 = vmatpush1.bf16.msra.mxu0 0
    %762 = vmatprep.subr.bf16.mxu0 0
    %763 = vmatpush1.bf16.msra.mxu0 0
    %764 = vmatprep.subr.bf16.mxu0 0
    %765 = vmatpush1.bf16.msra.mxu0 0
    %766 = vmatprep.subr.bf16.mxu0 0
    %767 = vmatpush1.bf16.msra.mxu0 0
    %768 = vmatprep.subr.bf16.mxu0 0
    %769 = vmatpush1.bf16.msra.mxu0 0
    %770 = vmatprep.subr.bf16.mxu0 0
    %771 = vmatpush1.bf16.msra.mxu0 0
    %772 = vmatprep.subr.bf16.mxu0 0
    %773 = vmatpush1.bf16.msra.mxu0 0
    %774 = vmatprep.subr.bf16.mxu0 0
    %775 = vmatpush1.bf16.msra.mxu0 0
    %776 = vmatprep.mubr.bf16.mxu0 0
    %777 = vmatmul.mubr.bf16.gmra.mrb[0].mxu0 %v276
    %v778 = vpop.f32.mrb[0].mxu0
    %v779 = vadd.f32 %v354, %v778
    %v780 = vpop.f32.mrb[0].mxu0
    %v781 = vadd.f32 %v358, %v780
    %v782 = vpop.f32.mrb[0].mxu0
    %v783 = vpop.f32.mrb[0].mxu0
    %784 = vdwg.mxu0
    %785 = vmatprep.subr.bf16.mxu0 %v580
    %786 = vmatpush1.bf16.msra.mxu0 %v579
    %787 = vmatprep.subr.bf16.mxu0 %v588
    %788 = vmatpush1.bf16.msra.mxu0 %v587
    %789 = vmatprep.subr.bf16.mxu0 %v596
    %790 = vmatpush1.bf16.msra.mxu0 %v595
    %791 = vmatprep.subr.bf16.mxu0 %v604
    %792 = vmatpush1.bf16.msra.mxu0 %v603
    %793 = vmatprep.subr.bf16.mxu0 %v612
    %794 = vmatpush1.bf16.msra.mxu0 %v611
    %795 = vmatprep.subr.bf16.mxu0 %v620
    %796 = vmatpush1.bf16.msra.mxu0 %v619
    %797 = vmatprep.subr.bf16.mxu0 %v628
    %798 = vmatpush1.bf16.msra.mxu0 %v627
    %799 = vmatprep.subr.bf16.mxu0 %v636
    %800 = vmatpush1.bf16.msra.mxu0 %v635
    %801 = vmatprep.subr.bf16.mxu0 0
    %802 = vmatpush1.bf16.msra.mxu0 0
    %803 = vmatprep.subr.bf16.mxu0 0
    %804 = vmatpush1.bf16.msra.mxu0 0
    %805 = vmatprep.subr.bf16.mxu0 0
    %806 = vmatpush1.bf16.msra.mxu0 0
    %807 = vmatprep.subr.bf16.mxu0 0
    %808 = vmatpush1.bf16.msra.mxu0 0
    %809 = vmatprep.subr.bf16.mxu0 0
    %810 = vmatpush1.bf16.msra.mxu0 0
    %811 = vmatprep.subr.bf16.mxu0 0
    %812 = vmatpush1.bf16.msra.mxu0 0
    %813 = vmatprep.subr.bf16.mxu0 0
    %814 = vmatpush1.bf16.msra.mxu0 0
    %815 = vmatprep.subr.bf16.mxu0 0
    %816 = vmatpush1.bf16.msra.mxu0 0
    %817 = vmatprep.mubr.bf16.mxu0 0
    %818 = vmatmul.mubr.bf16.gmra.mrb[0].mxu0 %v276
    %v819 = vpop.f32.mrb[0].mxu0
    %v820 = vadd.f32 %v362, %v819
    %v821 = vpop.f32.mrb[0].mxu0
    %v822 = vadd.f32 %v366, %v821
    %v823 = vpop.f32.mrb[0].mxu0
    %v824 = vpop.f32.mrb[0].mxu0
    %825 = vdwg.mxu0
    %826 = vmatprep.subr.bf16.mxu0 %v582
    %827 = vmatpush1.bf16.msra.mxu0 %v581
    %828 = vmatprep.subr.bf16.mxu0 %v590
    %829 = vmatpush1.bf16.msra.mxu0 %v589
    %830 = vmatprep.subr.bf16.mxu0 %v598
    %831 = vmatpush1.bf16.msra.mxu0 %v597
    %832 = vmatprep.subr.bf16.mxu0 %v606
    %833 = vmatpush1.bf16.msra.mxu0 %v605
    %834 = vmatprep.subr.bf16.mxu0 %v614
    %835 = vmatpush1.bf16.msra.mxu0 %v613
    %836 = vmatprep.subr.bf16.mxu0 %v622
    %837 = vmatpush1.bf16.msra.mxu0 %v621
    %838 = vmatprep.subr.bf16.mxu0 %v630
    %839 = vmatpush1.bf16.msra.mxu0 %v629
    %840 = vmatprep.subr.bf16.mxu0 %v638
    %841 = vmatpush1.bf16.msra.mxu0 %v637
    %842 = vmatprep.subr.bf16.mxu0 0
    %843 = vmatpush1.bf16.msra.mxu0 0
    %844 = vmatprep.subr.bf16.mxu0 0
    %845 = vmatpush1.bf16.msra.mxu0 0
    %846 = vmatprep.subr.bf16.mxu0 0
    %847 = vmatpush1.bf16.msra.mxu0 0
    %848 = vmatprep.subr.bf16.mxu0 0
    %849 = vmatpush1.bf16.msra.mxu0 0
    %850 = vmatprep.subr.bf16.mxu0 0
    %851 = vmatpush1.bf16.msra.mxu0 0
    %852 = vmatprep.subr.bf16.mxu0 0
    %853 = vmatpush1.bf16.msra.mxu0 0
    %854 = vmatprep.subr.bf16.mxu0 0
    %855 = vmatpush1.bf16.msra.mxu0 0
    %856 = vmatprep.subr.bf16.mxu0 0
    %857 = vmatpush1.bf16.msra.mxu0 0
    %858 = vmatprep.mubr.bf16.mxu0 0
    %859 = vmatmul.mubr.bf16.gmra.mrb[0].mxu0 %v276
    %v860 = vpop.f32.mrb[0].mxu0
    %v861 = vadd.f32 %v370, %v860
    %v862 = vpop.f32.mrb[0].mxu0
    %v863 = vadd.f32 %v374, %v862
    %v864 = vpop.f32.mrb[0].mxu0
    %v865 = vpop.f32.mrb[0].mxu0
    %866 = vdwg.mxu0
    %v867 = vmax.f32 %v738, 0.0
    %v868 = vmax.f32 %v740, 0.0
    %v869 = vmax.f32 %v779, 0.0
    %v870 = vmax.f32 %v781, 0.0
    %v871 = vmax.f32 %v820, 0.0
    %v872 = vmax.f32 %v822, 0.0
    %v873 = vmax.f32 %v861, 0.0
    %v874 = vmax.f32 %v863, 0.0
    %v875 = vpack.c.bf16 %v867, %v867
    %v876 = vpack.c.bf16 %v868, %v868
    %v877 = vpack.c.bf16 %v869, %v869
    %v878 = vpack.c.bf16 %v870, %v870
    %v879 = vpack.c.bf16 %v871, %v871
    %v880 = vpack.c.bf16 %v872, %v872
    %v881 = vpack.c.bf16 %v873, %v873
    %v882 = vpack.c.bf16 %v874, %v874
    %s883 = smul.u32 4, 128
    %s884 = smul.u32 %s883, 4
    %s885 = sshll.u32 %s884, 4
    %886 = dma.done [#allocation8], %s885
    %s887 = smul.u32 1, 4
    %s888 = sshll.u32 %s887, 4
    %889 = dma.done %s71, %s888
    %v890 = vld [vmem:[#allocation2] sm:$0xff]
    %v891 = vld [vmem:[#allocation2 + $0x8] sm:$0xff]
    %v892 = vld [vmem:[#allocation2 + $0x10] sm:$0xff]
    %v893 = vld [vmem:[#allocation2 + $0x18] sm:$0xff]
    %v894 = vld [vmem:[#allocation2 + $0x20] sm:$0xff]
    %v895 = vld [vmem:[#allocation2 + $0x28] sm:$0xff]
    %v896 = vld [vmem:[#allocation2 + $0x30] sm:$0xff]
    %v897 = vld [vmem:[#allocation2 + $0x38] sm:$0xff]
    %v898 = vld [vmem:[#allocation2 + $0x40] sm:$0xff]
    %v899 = vld [vmem:[#allocation2 + $0x48] sm:$0xff]
    %v900 = vld [vmem:[#allocation2 + $0x50] sm:$0xff]
    %v901 = vld [vmem:[#allocation2 + $0x58] sm:$0xff]
    %v902 = vld [vmem:[#allocation2 + $0x60] sm:$0xff]
    %v903 = vld [vmem:[#allocation2 + $0x68] sm:$0xff]
    %v904 = vld [vmem:[#allocation2 + $0x70] sm:$0xff]
    %v905 = vld [vmem:[#allocation2 + $0x78] sm:$0xff]
    %v906 = vld [vmem:[#allocation2 + $0x80] sm:$0xff]
    %v907 = vld [vmem:[#allocation2 + $0x88] sm:$0xff]
    %v908 = vld [vmem:[#allocation2 + $0x90] sm:$0xff]
    %v909 = vld [vmem:[#allocation2 + $0x98] sm:$0xff]
    %v910 = vld [vmem:[#allocation2 + $0xa0] sm:$0xff]
    %v911 = vld [vmem:[#allocation2 + $0xa8] sm:$0xff]
    %v912 = vld [vmem:[#allocation2 + $0xb0] sm:$0xff]
    %v913 = vld [vmem:[#allocation2 + $0xb8] sm:$0xff]
    %v914 = vld [vmem:[#allocation2 + $0xc0] sm:$0xff]
    %v915 = vld [vmem:[#allocation2 + $0xc8] sm:$0xff]
    %v916 = vld [vmem:[#allocation2 + $0xd0] sm:$0xff]
    %v917 = vld [vmem:[#allocation2 + $0xd8] sm:$0xff]
    %v918 = vld [vmem:[#allocation2 + $0xe0] sm:$0xff]
    %v919 = vld [vmem:[#allocation2 + $0xe8] sm:$0xff]
    %v920 = vld [vmem:[#allocation2 + $0xf0] sm:$0xff]
    %v921 = vld [vmem:[#allocation2 + $0xf8] sm:$0xff]
    %v922 = vld [vmem:[#allocation2 + $0x100] sm:$0xff]
    %v923 = vld [vmem:[#allocation2 + $0x108] sm:$0xff]
    %v924 = vld [vmem:[#allocation2 + $0x110] sm:$0xff]
    %v925 = vld [vmem:[#allocation2 + $0x118] sm:$0xff]
    %v926 = vld [vmem:[#allocation2 + $0x120] sm:$0xff]
    %v927 = vld [vmem:[#allocation2 + $0x128] sm:$0xff]
    %v928 = vld [vmem:[#allocation2 + $0x130] sm:$0xff]
    %v929 = vld [vmem:[#allocation2 + $0x138] sm:$0xff]
    %v930 = vld [vmem:[#allocation2 + $0x140] sm:$0xff]
    %v931 = vld [vmem:[#allocation2 + $0x148] sm:$0xff]
    %v932 = vld [vmem:[#allocation2 + $0x150] sm:$0xff]
    %v933 = vld [vmem:[#allocation2 + $0x158] sm:$0xff]
    %v934 = vld [vmem:[#allocation2 + $0x160] sm:$0xff]
    %v935 = vld [vmem:[#allocation2 + $0x168] sm:$0xff]
    %v936 = vld [vmem:[#allocation2 + $0x170] sm:$0xff]
    %v937 = vld [vmem:[#allocation2 + $0x178] sm:$0xff]
    %v938 = vld [vmem:[#allocation2 + $0x180] sm:$0xff]
    %v939 = vld [vmem:[#allocation2 + $0x188] sm:$0xff]
    %v940 = vld [vmem:[#allocation2 + $0x190] sm:$0xff]
    %v941 = vld [vmem:[#allocation2 + $0x198] sm:$0xff]
    %v942 = vld [vmem:[#allocation2 + $0x1a0] sm:$0xff]
    %v943 = vld [vmem:[#allocation2 + $0x1a8] sm:$0xff]
    %v944 = vld [vmem:[#allocation2 + $0x1b0] sm:$0xff]
    %v945 = vld [vmem:[#allocation2 + $0x1b8] sm:$0xff]
    %v946 = vld [vmem:[#allocation2 + $0x1c0] sm:$0xff]
    %v947 = vld [vmem:[#allocation2 + $0x1c8] sm:$0xff]
    %v948 = vld [vmem:[#allocation2 + $0x1d0] sm:$0xff]
    %v949 = vld [vmem:[#allocation2 + $0x1d8] sm:$0xff]
    %v950 = vld [vmem:[#allocation2 + $0x1e0] sm:$0xff]
    %v951 = vld [vmem:[#allocation2 + $0x1e8] sm:$0xff]
    %v952 = vld [vmem:[#allocation2 + $0x1f0] sm:$0xff]
    %v953 = vld [vmem:[#allocation2 + $0x1f8] sm:$0xff]
    %v954 = vld [vmem:[#allocation2 + $0x200] sm:$0xff]
    %v955 = vld [vmem:[#allocation2 + $0x208] sm:$0xff]
    %v956 = vld [vmem:[#allocation2 + $0x210] sm:$0xff]
    %v957 = vld [vmem:[#allocation2 + $0x218] sm:$0xff]
    %v958 = vld [vmem:[#allocation2 + $0x220] sm:$0xff]
    %v959 = vld [vmem:[#allocation2 + $0x228] sm:$0xff]
    %v960 = vld [vmem:[#allocation2 + $0x230] sm:$0xff]
    %v961 = vld [vmem:[#allocation2 + $0x238] sm:$0xff]
    %v962 = vld [vmem:[#allocation2 + $0x240] sm:$0xff]
    %v963 = vld [vmem:[#allocation2 + $0x248] sm:$0xff]
    %v964 = vld [vmem:[#allocation2 + $0x250] sm:$0xff]
    %v965 = vld [vmem:[#allocation2 + $0x258] sm:$0xff]
    %v966 = vld [vmem:[#allocation2 + $0x260] sm:$0xff]
    %v967 = vld [vmem:[#allocation2 + $0x268] sm:$0xff]
    %v968 = vld [vmem:[#allocation2 + $0x270] sm:$0xff]
    %v969 = vld [vmem:[#allocation2 + $0x278] sm:$0xff]
    %v970 = vld [vmem:[#allocation2 + $0x280] sm:$0xff]
    %v971 = vld [vmem:[#allocation2 + $0x288] sm:$0xff]
    %v972 = vld [vmem:[#allocation2 + $0x290] sm:$0xff]
    %v973 = vld [vmem:[#allocation2 + $0x298] sm:$0xff]
    %v974 = vld [vmem:[#allocation2 + $0x2a0] sm:$0xff]
    %v975 = vld [vmem:[#allocation2 + $0x2a8] sm:$0xff]
    %v976 = vld [vmem:[#allocation2 + $0x2b0] sm:$0xff]
    %v977 = vld [vmem:[#allocation2 + $0x2b8] sm:$0xff]
    %v978 = vld [vmem:[#allocation2 + $0x2c0] sm:$0xff]
    %v979 = vld [vmem:[#allocation2 + $0x2c8] sm:$0xff]
    %v980 = vld [vmem:[#allocation2 + $0x2d0] sm:$0xff]
    %v981 = vld [vmem:[#allocation2 + $0x2d8] sm:$0xff]
    %v982 = vld [vmem:[#allocation2 + $0x2e0] sm:$0xff]
    %v983 = vld [vmem:[#allocation2 + $0x2e8] sm:$0xff]
    %v984 = vld [vmem:[#allocation2 + $0x2f0] sm:$0xff]
    %v985 = vld [vmem:[#allocation2 + $0x2f8] sm:$0xff]
    %v986 = vld [vmem:[#allocation2 + $0x300] sm:$0xff]
    %v987 = vld [vmem:[#allocation2 + $0x308] sm:$0xff]
    %v988 = vld [vmem:[#allocation2 + $0x310] sm:$0xff]
    %v989 = vld [vmem:[#allocation2 + $0x318] sm:$0xff]
    %v990 = vld [vmem:[#allocation2 + $0x320] sm:$0xff]
    %v991 = vld [vmem:[#allocation2 + $0x328] sm:$0xff]
    %v992 = vld [vmem:[#allocation2 + $0x330] sm:$0xff]
    %v993 = vld [vmem:[#allocation2 + $0x338] sm:$0xff]
    %v994 = vld [vmem:[#allocation2 + $0x340] sm:$0xff]
    %v995 = vld [vmem:[#allocation2 + $0x348] sm:$0xff]
    %v996 = vld [vmem:[#allocation2 + $0x350] sm:$0xff]
    %v997 = vld [vmem:[#allocation2 + $0x358] sm:$0xff]
    %v998 = vld [vmem:[#allocation2 + $0x360] sm:$0xff]
    %v999 = vld [vmem:[#allocation2 + $0x368] sm:$0xff]
    %v1000 = vld [vmem:[#allocation2 + $0x370] sm:$0xff]
    %v1001 = vld [vmem:[#allocation2 + $0x378] sm:$0xff]
    %v1002 = vld [vmem:[#allocation2 + $0x380] sm:$0xff]
    %v1003 = vld [vmem:[#allocation2 + $0x388] sm:$0xff]
    %v1004 = vld [vmem:[#allocation2 + $0x390] sm:$0xff]
    %v1005 = vld [vmem:[#allocation2 + $0x398] sm:$0xff]
    %v1006 = vld [vmem:[#allocation2 + $0x3a0] sm:$0xff]
    %v1007 = vld [vmem:[#allocation2 + $0x3a8] sm:$0xff]
    %v1008 = vld [vmem:[#allocation2 + $0x3b0] sm:$0xff]
    %v1009 = vld [vmem:[#allocation2 + $0x3b8] sm:$0xff]
    %v1010 = vld [vmem:[#allocation2 + $0x3c0] sm:$0xff]
    %v1011 = vld [vmem:[#allocation2 + $0x3c8] sm:$0xff]
    %v1012 = vld [vmem:[#allocation2 + $0x3d0] sm:$0xff]
    %v1013 = vld [vmem:[#allocation2 + $0x3d8] sm:$0xff]
    %v1014 = vld [vmem:[#allocation2 + $0x3e0] sm:$0xff]
    %v1015 = vld [vmem:[#allocation2 + $0x3e8] sm:$0xff]
    %v1016 = vld [vmem:[#allocation2 + $0x3f0] sm:$0xff]
    %v1017 = vld [vmem:[#allocation2 + $0x3f8] sm:$0xff]
    %v1018 = vld [vmem:[#allocation2 + $0x400] sm:$0xff]
    %v1019 = vld [vmem:[#allocation2 + $0x408] sm:$0xff]
    %v1020 = vld [vmem:[#allocation2 + $0x410] sm:$0xff]
    %v1021 = vld [vmem:[#allocation2 + $0x418] sm:$0xff]
    %v1022 = vld [vmem:[#allocation2 + $0x420] sm:$0xff]
    %v1023 = vld [vmem:[#allocation2 + $0x428] sm:$0xff]
    %v1024 = vld [vmem:[#allocation2 + $0x430] sm:$0xff]
    %v1025 = vld [vmem:[#allocation2 + $0x438] sm:$0xff]
    %v1026 = vld [vmem:[#allocation2 + $0x440] sm:$0xff]
    %v1027 = vld [vmem:[#allocation2 + $0x448] sm:$0xff]
    %v1028 = vld [vmem:[#allocation2 + $0x450] sm:$0xff]
    %v1029 = vld [vmem:[#allocation2 + $0x458] sm:$0xff]
    %v1030 = vld [vmem:[#allocation2 + $0x460] sm:$0xff]
    %v1031 = vld [vmem:[#allocation2 + $0x468] sm:$0xff]
    %v1032 = vld [vmem:[#allocation2 + $0x470] sm:$0xff]
    %v1033 = vld [vmem:[#allocation2 + $0x478] sm:$0xff]
    %v1034 = vld [vmem:[#allocation2 + $0x480] sm:$0xff]
    %v1035 = vld [vmem:[#allocation2 + $0x488] sm:$0xff]
    %v1036 = vld [vmem:[#allocation2 + $0x490] sm:$0xff]
    %v1037 = vld [vmem:[#allocation2 + $0x498] sm:$0xff]
    %v1038 = vld [vmem:[#allocation2 + $0x4a0] sm:$0xff]
    %v1039 = vld [vmem:[#allocation2 + $0x4a8] sm:$0xff]
    %v1040 = vld [vmem:[#allocation2 + $0x4b0] sm:$0xff]
    %v1041 = vld [vmem:[#allocation2 + $0x4b8] sm:$0xff]
    %v1042 = vld [vmem:[#allocation2 + $0x4c0] sm:$0xff]
    %v1043 = vld [vmem:[#allocation2 + $0x4c8] sm:$0xff]
    %v1044 = vld [vmem:[#allocation2 + $0x4d0] sm:$0xff]
    %v1045 = vld [vmem:[#allocation2 + $0x4d8] sm:$0xff]
    %v1046 = vld [vmem:[#allocation2 + $0x4e0] sm:$0xff]
    %v1047 = vld [vmem:[#allocation2 + $0x4e8] sm:$0xff]
    %v1048 = vld [vmem:[#allocation2 + $0x4f0] sm:$0xff]
    %v1049 = vld [vmem:[#allocation2 + $0x4f8] sm:$0xff]
    %v1050 = vld [vmem:[#allocation2 + $0x500] sm:$0xff]
    %v1051 = vld [vmem:[#allocation2 + $0x508] sm:$0xff]
    %v1052 = vld [vmem:[#allocation2 + $0x510] sm:$0xff]
    %v1053 = vld [vmem:[#allocation2 + $0x518] sm:$0xff]
    %v1054 = vld [vmem:[#allocation2 + $0x520] sm:$0xff]
    %v1055 = vld [vmem:[#allocation2 + $0x528] sm:$0xff]
    %v1056 = vld [vmem:[#allocation2 + $0x530] sm:$0xff]
    %v1057 = vld [vmem:[#allocation2 + $0x538] sm:$0xff]
    %v1058 = vld [vmem:[#allocation2 + $0x540] sm:$0xff]
    %v1059 = vld [vmem:[#allocation2 + $0x548] sm:$0xff]
    %v1060 = vld [vmem:[#allocation2 + $0x550] sm:$0xff]
    %v1061 = vld [vmem:[#allocation2 + $0x558] sm:$0xff]
    %v1062 = vld [vmem:[#allocation2 + $0x560] sm:$0xff]
    %v1063 = vld [vmem:[#allocation2 + $0x568] sm:$0xff]
    %v1064 = vld [vmem:[#allocation2 + $0x570] sm:$0xff]
    %v1065 = vld [vmem:[#allocation2 + $0x578] sm:$0xff]
    %v1066 = vld [vmem:[#allocation2 + $0x580] sm:$0xff]
    %v1067 = vld [vmem:[#allocation2 + $0x588] sm:$0xff]
    %v1068 = vld [vmem:[#allocation2 + $0x590] sm:$0xff]
    %v1069 = vld [vmem:[#allocation2 + $0x598] sm:$0xff]
    %v1070 = vld [vmem:[#allocation2 + $0x5a0] sm:$0xff]
    %v1071 = vld [vmem:[#allocation2 + $0x5a8] sm:$0xff]
    %v1072 = vld [vmem:[#allocation2 + $0x5b0] sm:$0xff]
    %v1073 = vld [vmem:[#allocation2 + $0x5b8] sm:$0xff]
    %v1074 = vld [vmem:[#allocation2 + $0x5c0] sm:$0xff]
    %v1075 = vld [vmem:[#allocation2 + $0x5c8] sm:$0xff]
    %v1076 = vld [vmem:[#allocation2 + $0x5d0] sm:$0xff]
    %v1077 = vld [vmem:[#allocation2 + $0x5d8] sm:$0xff]
    %v1078 = vld [vmem:[#allocation2 + $0x5e0] sm:$0xff]
    %v1079 = vld [vmem:[#allocation2 + $0x5e8] sm:$0xff]
    %v1080 = vld [vmem:[#allocation2 + $0x5f0] sm:$0xff]
    %v1081 = vld [vmem:[#allocation2 + $0x5f8] sm:$0xff]
    %v1082 = vld [vmem:[#allocation2 + $0x600] sm:$0xff]
    %v1083 = vld [vmem:[#allocation2 + $0x608] sm:$0xff]
    %v1084 = vld [vmem:[#allocation2 + $0x610] sm:$0xff]
    %v1085 = vld [vmem:[#allocation2 + $0x618] sm:$0xff]
    %v1086 = vld [vmem:[#allocation2 + $0x620] sm:$0xff]
    %v1087 = vld [vmem:[#allocation2 + $0x628] sm:$0xff]
    %v1088 = vld [vmem:[#allocation2 + $0x630] sm:$0xff]
    %v1089 = vld [vmem:[#allocation2 + $0x638] sm:$0xff]
    %v1090 = vld [vmem:[#allocation2 + $0x640] sm:$0xff]
    %v1091 = vld [vmem:[#allocation2 + $0x648] sm:$0xff]
    %v1092 = vld [vmem:[#allocation2 + $0x650] sm:$0xff]
    %v1093 = vld [vmem:[#allocation2 + $0x658] sm:$0xff]
    %v1094 = vld [vmem:[#allocation2 + $0x660] sm:$0xff]
    %v1095 = vld [vmem:[#allocation2 + $0x668] sm:$0xff]
    %v1096 = vld [vmem:[#allocation2 + $0x670] sm:$0xff]
    %v1097 = vld [vmem:[#allocation2 + $0x678] sm:$0xff]
    %v1098 = vld [vmem:[#allocation2 + $0x680] sm:$0xff]
    %v1099 = vld [vmem:[#allocation2 + $0x688] sm:$0xff]
    %v1100 = vld [vmem:[#allocation2 + $0x690] sm:$0xff]
    %v1101 = vld [vmem:[#allocation2 + $0x698] sm:$0xff]
    %v1102 = vld [vmem:[#allocation2 + $0x6a0] sm:$0xff]
    %v1103 = vld [vmem:[#allocation2 + $0x6a8] sm:$0xff]
    %v1104 = vld [vmem:[#allocation2 + $0x6b0] sm:$0xff]
    %v1105 = vld [vmem:[#allocation2 + $0x6b8] sm:$0xff]
    %v1106 = vld [vmem:[#allocation2 + $0x6c0] sm:$0xff]
    %v1107 = vld [vmem:[#allocation2 + $0x6c8] sm:$0xff]
    %v1108 = vld [vmem:[#allocation2 + $0x6d0] sm:$0xff]
    %v1109 = vld [vmem:[#allocation2 + $0x6d8] sm:$0xff]
    %v1110 = vld [vmem:[#allocation2 + $0x6e0] sm:$0xff]
    %v1111 = vld [vmem:[#allocation2 + $0x6e8] sm:$0xff]
    %v1112 = vld [vmem:[#allocation2 + $0x6f0] sm:$0xff]
    %v1113 = vld [vmem:[#allocation2 + $0x6f8] sm:$0xff]
    %v1114 = vld [vmem:[#allocation2 + $0x700] sm:$0xff]
    %v1115 = vld [vmem:[#allocation2 + $0x708] sm:$0xff]
    %v1116 = vld [vmem:[#allocation2 + $0x710] sm:$0xff]
    %v1117 = vld [vmem:[#allocation2 + $0x718] sm:$0xff]
    %v1118 = vld [vmem:[#allocation2 + $0x720] sm:$0xff]
    %v1119 = vld [vmem:[#allocation2 + $0x728] sm:$0xff]
    %v1120 = vld [vmem:[#allocation2 + $0x730] sm:$0xff]
    %v1121 = vld [vmem:[#allocation2 + $0x738] sm:$0xff]
    %v1122 = vld [vmem:[#allocation2 + $0x740] sm:$0xff]
    %v1123 = vld [vmem:[#allocation2 + $0x748] sm:$0xff]
    %v1124 = vld [vmem:[#allocation2 + $0x750] sm:$0xff]
    %v1125 = vld [vmem:[#allocation2 + $0x758] sm:$0xff]
    %v1126 = vld [vmem:[#allocation2 + $0x760] sm:$0xff]
    %v1127 = vld [vmem:[#allocation2 + $0x768] sm:$0xff]
    %v1128 = vld [vmem:[#allocation2 + $0x770] sm:$0xff]
    %v1129 = vld [vmem:[#allocation2 + $0x778] sm:$0xff]
    %v1130 = vld [vmem:[#allocation2 + $0x780] sm:$0xff]
    %v1131 = vld [vmem:[#allocation2 + $0x788] sm:$0xff]
    %v1132 = vld [vmem:[#allocation2 + $0x790] sm:$0xff]
    %v1133 = vld [vmem:[#allocation2 + $0x798] sm:$0xff]
    %v1134 = vld [vmem:[#allocation2 + $0x7a0] sm:$0xff]
    %v1135 = vld [vmem:[#allocation2 + $0x7a8] sm:$0xff]
    %v1136 = vld [vmem:[#allocation2 + $0x7b0] sm:$0xff]
    %v1137 = vld [vmem:[#allocation2 + $0x7b8] sm:$0xff]
    %v1138 = vld [vmem:[#allocation2 + $0x7c0] sm:$0xff]
    %v1139 = vld [vmem:[#allocation2 + $0x7c8] sm:$0xff]
    %v1140 = vld [vmem:[#allocation2 + $0x7d0] sm:$0xff]
    %v1141 = vld [vmem:[#allocation2 + $0x7d8] sm:$0xff]
    %v1142 = vld [vmem:[#allocation2 + $0x7e0] sm:$0xff]
    %v1143 = vld [vmem:[#allocation2 + $0x7e8] sm:$0xff]
    %v1144 = vld [vmem:[#allocation2 + $0x7f0] sm:$0xff]
    %v1145 = vld [vmem:[#allocation2 + $0x7f8] sm:$0xff]
    %v1146 = vld [vmem:[#allocation3] sm:$0xf]
    %v1148 = vlaneseq
    %v1149 = vshrl.u32 %v1148, 7
    %v1150 = vsub.s32 0, %v1149
    %v1151 = vrot.slane %v1146, %v1150
    %v1152 = vlaneseq
    %v1153 = vshrl.u32 %v1152, 7
    %v1154 = vsub.s32 1, %v1153
    %v1155 = vrot.slane %v1146, %v1154
    %v1156 = vlaneseq
    %v1157 = vshrl.u32 %v1156, 7
    %v1158 = vsub.s32 2, %v1157
    %v1159 = vrot.slane %v1146, %v1158
    %v1160 = vlaneseq
    %v1161 = vshrl.u32 %v1160, 7
    %v1162 = vsub.s32 3, %v1161
    %v1163 = vrot.slane %v1146, %v1162
    %1168 = vmatprep.subr.bf16.mxu0 %v891
    %1169 = vmatpush1.bf16.msra.mxu0 %v890
    %1170 = vmatprep.subr.bf16.mxu0 %v895
    %1171 = vmatpush1.bf16.msra.mxu0 %v894
    %1172 = vmatprep.subr.bf16.mxu0 %v899
    %1173 = vmatpush1.bf16.msra.mxu0 %v898
    %1174 = vmatprep.subr.bf16.mxu0 %v903
    %1175 = vmatpush1.bf16.msra.mxu0 %v902
    %1176 = vmatprep.subr.bf16.mxu0 %v907
    %1177 = vmatpush1.bf16.msra.mxu0 %v906
    %1178 = vmatprep.subr.bf16.mxu0 %v911
    %1179 = vmatpush1.bf16.msra.mxu0 %v910
    %1180 = vmatprep.subr.bf16.mxu0 %v915
    %1181 = vmatpush1.bf16.msra.mxu0 %v914
    %1182 = vmatprep.subr.bf16.mxu0 %v919
    %1183 = vmatpush1.bf16.msra.mxu0 %v918
    %1184 = vmatprep.subr.bf16.mxu0 %v923
    %1185 = vmatpush1.bf16.msra.mxu0 %v922
    %1186 = vmatprep.subr.bf16.mxu0 %v927
    %1187 = vmatpush1.bf16.msra.mxu0 %v926
    %1188 = vmatprep.subr.bf16.mxu0 %v931
    %1189 = vmatpush1.bf16.msra.mxu0 %v930
    %1190 = vmatprep.subr.bf16.mxu0 %v935
    %1191 = vmatpush1.bf16.msra.mxu0 %v934
    %1192 = vmatprep.subr.bf16.mxu0 %v939
    %1193 = vmatpush1.bf16.msra.mxu0 %v938
    %1194 = vmatprep.subr.bf16.mxu0 %v943
    %1195 = vmatpush1.bf16.msra.mxu0 %v942
    %1196 = vmatprep.subr.bf16.mxu0 %v947
    %1197 = vmatpush1.bf16.msra.mxu0 %v946
    %1198 = vmatprep.subr.bf16.mxu0 %v951
    %1199 = vmatpush1.bf16.msra.mxu0 %v950
    %1200 = vmatprep.mubr.bf16.mxu0 %v876
    %1201 = vmatmul.mubr.bf16.gmra.mrb[0].mxu0 %v875
    %v1202 = vpop.f32.mrb[0].mxu0
    %v1203 = vadd.f32 %v1151, %v1202
    %v1204 = vpop.f32.mrb[0].mxu0
    %v1205 = vadd.f32 %v1155, %v1204
    %v1206 = vpop.f32.mrb[0].mxu0
    %v1207 = vpop.f32.mrb[0].mxu0
    %1208 = vdwg.mxu0
    %1209 = vmatprep.subr.bf16.mxu0 %v955
    %1210 = vmatpush1.bf16.msra.mxu0 %v954
    %1211 = vmatprep.subr.bf16.mxu0 %v959
    %1212 = vmatpush1.bf16.msra.mxu0 %v958
    %1213 = vmatprep.subr.bf16.mxu0 %v963
    %1214 = vmatpush1.bf16.msra.mxu0 %v962
    %1215 = vmatprep.subr.bf16.mxu0 %v967
    %1216 = vmatpush1.bf16.msra.mxu0 %v966
    %1217 = vmatprep.subr.bf16.mxu0 %v971
    %1218 = vmatpush1.bf16.msra.mxu0 %v970
    %1219 = vmatprep.subr.bf16.mxu0 %v975
    %1220 = vmatpush1.bf16.msra.mxu0 %v974
    %1221 = vmatprep.subr.bf16.mxu0 %v979
    %1222 = vmatpush1.bf16.msra.mxu0 %v978
    %1223 = vmatprep.subr.bf16.mxu0 %v983
    %1224 = vmatpush1.bf16.msra.mxu0 %v982
    %1225 = vmatprep.subr.bf16.mxu0 %v987
    %1226 = vmatpush1.bf16.msra.mxu0 %v986
    %1227 = vmatprep.subr.bf16.mxu0 %v991
    %1228 = vmatpush1.bf16.msra.mxu0 %v990
    %1229 = vmatprep.subr.bf16.mxu0 %v995
    %1230 = vmatpush1.bf16.msra.mxu0 %v994
    %1231 = vmatprep.subr.bf16.mxu0 %v999
    %1232 = vmatpush1.bf16.msra.mxu0 %v998
    %1233 = vmatprep.subr.bf16.mxu0 %v1003
    %1234 = vmatpush1.bf16.msra.mxu0 %v1002
    %1235 = vmatprep.subr.bf16.mxu0 %v1007
    %1236 = vmatpush1.bf16.msra.mxu0 %v1006
    %1237 = vmatprep.subr.bf16.mxu0 %v1011
    %1238 = vmatpush1.bf16.msra.mxu0 %v1010
    %1239 = vmatprep.subr.bf16.mxu0 %v1015
    %1240 = vmatpush1.bf16.msra.mxu0 %v1014
    %1241 = vmatprep.mubr.bf16.mxu0 %v878
    %1242 = vmatmul.mubr.bf16.gmra.mrb[0].mxu0 %v877
    %v1243 = vpop.f32.mrb[0].mxu0
    %v1244 = vadd.f32 %v1203, %v1243
    %v1245 = vpop.f32.mrb[0].mxu0
    %v1246 = vadd.f32 %v1205, %v1245
    %v1247 = vpop.f32.mrb[0].mxu0
    %v1248 = vpop.f32.mrb[0].mxu0
    %1249 = vdwg.mxu0
    %1250 = vmatprep.subr.bf16.mxu0 %v1019
    %1251 = vmatpush1.bf16.msra.mxu0 %v1018
    %1252 = vmatprep.subr.bf16.mxu0 %v1023
    %1253 = vmatpush1.bf16.msra.mxu0 %v1022
    %1254 = vmatprep.subr.bf16.mxu0 %v1027
    %1255 = vmatpush1.bf16.msra.mxu0 %v1026
    %1256 = vmatprep.subr.bf16.mxu0 %v1031
    %1257 = vmatpush1.bf16.msra.mxu0 %v1030
    %1258 = vmatprep.subr.bf16.mxu0 %v1035
    %1259 = vmatpush1.bf16.msra.mxu0 %v1034
    %1260 = vmatprep.subr.bf16.mxu0 %v1039
    %1261 = vmatpush1.bf16.msra.mxu0 %v1038
    %1262 = vmatprep.subr.bf16.mxu0 %v1043
    %1263 = vmatpush1.bf16.msra.mxu0 %v1042
    %1264 = vmatprep.subr.bf16.mxu0 %v1047
    %1265 = vmatpush1.bf16.msra.mxu0 %v1046
    %1266 = vmatprep.subr.bf16.mxu0 %v1051
    %1267 = vmatpush1.bf16.msra.mxu0 %v1050
    %1268 = vmatprep.subr.bf16.mxu0 %v1055
    %1269 = vmatpush1.bf16.msra.mxu0 %v1054
    %1270 = vmatprep.subr.bf16.mxu0 %v1059
    %1271 = vmatpush1.bf16.msra.mxu0 %v1058
    %1272 = vmatprep.subr.bf16.mxu0 %v1063
    %1273 = vmatpush1.bf16.msra.mxu0 %v1062
    %1274 = vmatprep.subr.bf16.mxu0 %v1067
    %1275 = vmatpush1.bf16.msra.mxu0 %v1066
    %1276 = vmatprep.subr.bf16.mxu0 %v1071
    %1277 = vmatpush1.bf16.msra.mxu0 %v1070
    %1278 = vmatprep.subr.bf16.mxu0 %v1075
    %1279 = vmatpush1.bf16.msra.mxu0 %v1074
    %1280 = vmatprep.subr.bf16.mxu0 %v1079
    %1281 = vmatpush1.bf16.msra.mxu0 %v1078
    %1282 = vmatprep.mubr.bf16.mxu0 %v880
    %1283 = vmatmul.mubr.bf16.gmra.mrb[0].mxu0 %v879
    %v1284 = vpop.f32.mrb[0].mxu0
    %v1285 = vadd.f32 %v1244, %v1284
    %v1286 = vpop.f32.mrb[0].mxu0
    %v1287 = vadd.f32 %v1246, %v1286
    %v1288 = vpop.f32.mrb[0].mxu0
    %v1289 = vpop.f32.mrb[0].mxu0
    %1290 = vdwg.mxu0
    %1291 = vmatprep.subr.bf16.mxu0 %v1083
    %1292 = vmatpush1.bf16.msra.mxu0 %v1082
    %1293 = vmatprep.subr.bf16.mxu0 %v1087
    %1294 = vmatpush1.bf16.msra.mxu0 %v1086
    %1295 = vmatprep.subr.bf16.mxu0 %v1091
    %1296 = vmatpush1.bf16.msra.mxu0 %v1090
    %1297 = vmatprep.subr.bf16.mxu0 %v1095
    %1298 = vmatpush1.bf16.msra.mxu0 %v1094
    %1299 = vmatprep.subr.bf16.mxu0 %v1099
    %1300 = vmatpush1.bf16.msra.mxu0 %v1098
    %1301 = vmatprep.subr.bf16.mxu0 %v1103
    %1302 = vmatpush1.bf16.msra.mxu0 %v1102
    %1303 = vmatprep.subr.bf16.mxu0 %v1107
    %1304 = vmatpush1.bf16.msra.mxu0 %v1106
    %1305 = vmatprep.subr.bf16.mxu0 %v1111
    %1306 = vmatpush1.bf16.msra.mxu0 %v1110
    %1307 = vmatprep.subr.bf16.mxu0 %v1115
    %1308 = vmatpush1.bf16.msra.mxu0 %v1114
    %1309 = vmatprep.subr.bf16.mxu0 %v1119
    %1310 = vmatpush1.bf16.msra.mxu0 %v1118
    %1311 = vmatprep.subr.bf16.mxu0 %v1123
    %1312 = vmatpush1.bf16.msra.mxu0 %v1122
    %1313 = vmatprep.subr.bf16.mxu0 %v1127
    %1314 = vmatpush1.bf16.msra.mxu0 %v1126
    %1315 = vmatprep.subr.bf16.mxu0 %v1131
    %1316 = vmatpush1.bf16.msra.mxu0 %v1130
    %1317 = vmatprep.subr.bf16.mxu0 %v1135
    %1318 = vmatpush1.bf16.msra.mxu0 %v1134
    %1319 = vmatprep.subr.bf16.mxu0 %v1139
    %1320 = vmatpush1.bf16.msra.mxu0 %v1138
    %1321 = vmatprep.subr.bf16.mxu0 %v1143
    %1322 = vmatpush1.bf16.msra.mxu0 %v1142
    %1323 = vmatprep.mubr.bf16.mxu0 %v882
    %1324 = vmatmul.mubr.bf16.gmra.mrb[0].mxu0 %v881
    %v1325 = vpop.f32.mrb[0].mxu0
    %v1326 = vadd.f32 %v1285, %v1325
    %v1327 = vpop.f32.mrb[0].mxu0
    %v1328 = vadd.f32 %v1287, %v1327
    %v1329 = vpop.f32.mrb[0].mxu0
    %v1330 = vpop.f32.mrb[0].mxu0
    %1331 = vdwg.mxu0
    %1332 = vmatprep.subr.bf16.mxu0 %v893
    %1333 = vmatpush1.bf16.msra.mxu0 %v892
    %1334 = vmatprep.subr.bf16.mxu0 %v897
    %1335 = vmatpush1.bf16.msra.mxu0 %v896
    %1336 = vmatprep.subr.bf16.mxu0 %v901
    %1337 = vmatpush1.bf16.msra.mxu0 %v900
    %1338 = vmatprep.subr.bf16.mxu0 %v905
    %1339 = vmatpush1.bf16.msra.mxu0 %v904
    %1340 = vmatprep.subr.bf16.mxu0 %v909
    %1341 = vmatpush1.bf16.msra.mxu0 %v908
    %1342 = vmatprep.subr.bf16.mxu0 %v913
    %1343 = vmatpush1.bf16.msra.mxu0 %v912
    %1344 = vmatprep.subr.bf16.mxu0 %v917
    %1345 = vmatpush1.bf16.msra.mxu0 %v916
    %1346 = vmatprep.subr.bf16.mxu0 %v921
    %1347 = vmatpush1.bf16.msra.mxu0 %v920
    %1348 = vmatprep.subr.bf16.mxu0 %v925
    %1349 = vmatpush1.bf16.msra.mxu0 %v924
    %1350 = vmatprep.subr.bf16.mxu0 %v929
    %1351 = vmatpush1.bf16.msra.mxu0 %v928
    %1352 = vmatprep.subr.bf16.mxu0 %v933
    %1353 = vmatpush1.bf16.msra.mxu0 %v932
    %1354 = vmatprep.subr.bf16.mxu0 %v937
    %1355 = vmatpush1.bf16.msra.mxu0 %v936
    %1356 = vmatprep.subr.bf16.mxu0 %v941
    %1357 = vmatpush1.bf16.msra.mxu0 %v940
    %1358 = vmatprep.subr.bf16.mxu0 %v945
    %1359 = vmatpush1.bf16.msra.mxu0 %v944
    %1360 = vmatprep.subr.bf16.mxu0 %v949
    %1361 = vmatpush1.bf16.msra.mxu0 %v948
    %1362 = vmatprep.subr.bf16.mxu0 %v953
    %1363 = vmatpush1.bf16.msra.mxu0 %v952
    %1364 = vmatprep.mubr.bf16.mxu0 %v876
    %1365 = vmatmul.mubr.bf16.gmra.mrb[0].mxu0 %v875
    %v1366 = vpop.f32.mrb[0].mxu0
    %v1367 = vadd.f32 %v1159, %v1366
    %v1368 = vpop.f32.mrb[0].mxu0
    %v1369 = vadd.f32 %v1163, %v1368
    %v1370 = vpop.f32.mrb[0].mxu0
    %v1371 = vpop.f32.mrb[0].mxu0
    %1372 = vdwg.mxu0
    %1373 = vmatprep.subr.bf16.mxu0 %v957
    %1374 = vmatpush1.bf16.msra.mxu0 %v956
    %1375 = vmatprep.subr.bf16.mxu0 %v961
    %1376 = vmatpush1.bf16.msra.mxu0 %v960
    %1377 = vmatprep.subr.bf16.mxu0 %v965
    %1378 = vmatpush1.bf16.msra.mxu0 %v964
    %1379 = vmatprep.subr.bf16.mxu0 %v969
    %1380 = vmatpush1.bf16.msra.mxu0 %v968
    %1381 = vmatprep.subr.bf16.mxu0 %v973
    %1382 = vmatpush1.bf16.msra.mxu0 %v972
    %1383 = vmatprep.subr.bf16.mxu0 %v977
    %1384 = vmatpush1.bf16.msra.mxu0 %v976
    %1385 = vmatprep.subr.bf16.mxu0 %v981
    %1386 = vmatpush1.bf16.msra.mxu0 %v980
    %1387 = vmatprep.subr.bf16.mxu0 %v985
    %1388 = vmatpush1.bf16.msra.mxu0 %v984
    %1389 = vmatprep.subr.bf16.mxu0 %v989
    %1390 = vmatpush1.bf16.msra.mxu0 %v988
    %1391 = vmatprep.subr.bf16.mxu0 %v993
    %1392 = vmatpush1.bf16.msra.mxu0 %v992
    %1393 = vmatprep.subr.bf16.mxu0 %v997
    %1394 = vmatpush1.bf16.msra.mxu0 %v996
    %1395 = vmatprep.subr.bf16.mxu0 %v1001
    %1396 = vmatpush1.bf16.msra.mxu0 %v1000
    %1397 = vmatprep.subr.bf16.mxu0 %v1005
    %1398 = vmatpush1.bf16.msra.mxu0 %v1004
    %1399 = vmatprep.subr.bf16.mxu0 %v1009
    %1400 = vmatpush1.bf16.msra.mxu0 %v1008
    %1401 = vmatprep.subr.bf16.mxu0 %v1013
    %1402 = vmatpush1.bf16.msra.mxu0 %v1012
    %1403 = vmatprep.subr.bf16.mxu0 %v1017
    %1404 = vmatpush1.bf16.msra.mxu0 %v1016
    %1405 = vmatprep.mubr.bf16.mxu0 %v878
    %1406 = vmatmul.mubr.bf16.gmra.mrb[0].mxu0 %v877
    %v1407 = vpop.f32.mrb[0].mxu0
    %v1408 = vadd.f32 %v1367, %v1407
    %v1409 = vpop.f32.mrb[0].mxu0
    %v1410 = vadd.f32 %v1369, %v1409
    %v1411 = vpop.f32.mrb[0].mxu0
    %v1412 = vpop.f32.mrb[0].mxu0
    %1413 = vdwg.mxu0
    %1414 = vmatprep.subr.bf16.mxu0 %v1021
    %1415 = vmatpush1.bf16.msra.mxu0 %v1020
    %1416 = vmatprep.subr.bf16.mxu0 %v1025
    %1417 = vmatpush1.bf16.msra.mxu0 %v1024
    %1418 = vmatprep.subr.bf16.mxu0 %v1029
    %1419 = vmatpush1.bf16.msra.mxu0 %v1028
    %1420 = vmatprep.subr.bf16.mxu0 %v1033
    %1421 = vmatpush1.bf16.msra.mxu0 %v1032
    %1422 = vmatprep.subr.bf16.mxu0 %v1037
    %1423 = vmatpush1.bf16.msra.mxu0 %v1036
    %1424 = vmatprep.subr.bf16.mxu0 %v1041
    %1425 = vmatpush1.bf16.msra.mxu0 %v1040
    %1426 = vmatprep.subr.bf16.mxu0 %v1045
    %1427 = vmatpush1.bf16.msra.mxu0 %v1044
    %1428 = vmatprep.subr.bf16.mxu0 %v1049
    %1429 = vmatpush1.bf16.msra.mxu0 %v1048
    %1430 = vmatprep.subr.bf16.mxu0 %v1053
    %1431 = vmatpush1.bf16.msra.mxu0 %v1052
    %1432 = vmatprep.subr.bf16.mxu0 %v1057
    %1433 = vmatpush1.bf16.msra.mxu0 %v1056
    %1434 = vmatprep.subr.bf16.mxu0 %v1061
    %1435 = vmatpush1.bf16.msra.mxu0 %v1060
    %1436 = vmatprep.subr.bf16.mxu0 %v1065
    %1437 = vmatpush1.bf16.msra.mxu0 %v1064
    %1438 = vmatprep.subr.bf16.mxu0 %v1069
    %1439 = vmatpush1.bf16.msra.mxu0 %v1068
    %1440 = vmatprep.subr.bf16.mxu0 %v1073
    %1441 = vmatpush1.bf16.msra.mxu0 %v1072
    %1442 = vmatprep.subr.bf16.mxu0 %v1077
    %1443 = vmatpush1.bf16.msra.mxu0 %v1076
    %1444 = vmatprep.subr.bf16.mxu0 %v1081
    %1445 = vmatpush1.bf16.msra.mxu0 %v1080
    %1446 = vmatprep.mubr.bf16.mxu0 %v880
    %1447 = vmatmul.mubr.bf16.gmra.mrb[0].mxu0 %v879
    %v1448 = vpop.f32.mrb[0].mxu0
    %v1449 = vadd.f32 %v1408, %v1448
    %v1450 = vpop.f32.mrb[0].mxu0
    %v1451 = vadd.f32 %v1410, %v1450
    %v1452 = vpop.f32.mrb[0].mxu0
    %v1453 = vpop.f32.mrb[0].mxu0
    %1454 = vdwg.mxu0
    %1455 = vmatprep.subr.bf16.mxu0 %v1085
    %1456 = vmatpush1.bf16.msra.mxu0 %v1084
    %1457 = vmatprep.subr.bf16.mxu0 %v1089
    %1458 = vmatpush1.bf16.msra.mxu0 %v1088
    %1459 = vmatprep.subr.bf16.mxu0 %v1093
    %1460 = vmatpush1.bf16.msra.mxu0 %v1092
    %1461 = vmatprep.subr.bf16.mxu0 %v1097
    %1462 = vmatpush1.bf16.msra.mxu0 %v1096
    %1463 = vmatprep.subr.bf16.mxu0 %v1101
    %1464 = vmatpush1.bf16.msra.mxu0 %v1100
    %1465 = vmatprep.subr.bf16.mxu0 %v1105
    %1466 = vmatpush1.bf16.msra.mxu0 %v1104
    %1467 = vmatprep.subr.bf16.mxu0 %v1109
    %1468 = vmatpush1.bf16.msra.mxu0 %v1108
    %1469 = vmatprep.subr.bf16.mxu0 %v1113
    %1470 = vmatpush1.bf16.msra.mxu0 %v1112
    %1471 = vmatprep.subr.bf16.mxu0 %v1117
    %1472 = vmatpush1.bf16.msra.mxu0 %v1116
    %1473 = vmatprep.subr.bf16.mxu0 %v1121
    %1474 = vmatpush1.bf16.msra.mxu0 %v1120
    %1475 = vmatprep.subr.bf16.mxu0 %v1125
    %1476 = vmatpush1.bf16.msra.mxu0 %v1124
    %1477 = vmatprep.subr.bf16.mxu0 %v1129
    %1478 = vmatpush1.bf16.msra.mxu0 %v1128
    %1479 = vmatprep.subr.bf16.mxu0 %v1133
    %1480 = vmatpush1.bf16.msra.mxu0 %v1132
    %1481 = vmatprep.subr.bf16.mxu0 %v1137
    %1482 = vmatpush1.bf16.msra.mxu0 %v1136
    %1483 = vmatprep.subr.bf16.mxu0 %v1141
    %1484 = vmatpush1.bf16.msra.mxu0 %v1140
    %1485 = vmatprep.subr.bf16.mxu0 %v1145
    %1486 = vmatpush1.bf16.msra.mxu0 %v1144
    %1487 = vmatprep.mubr.bf16.mxu0 %v882
    %1488 = vmatmul.mubr.bf16.gmra.mrb[0].mxu0 %v881
    %v1489 = vpop.f32.mrb[0].mxu0
    %v1490 = vadd.f32 %v1449, %v1489
    %v1491 = vpop.f32.mrb[0].mxu0
    %v1492 = vadd.f32 %v1451, %v1491
    %v1493 = vpop.f32.mrb[0].mxu0
    %v1494 = vpop.f32.mrb[0].mxu0
    %1495 = vdwg.mxu0
    %v1496 = vmax.f32 %v1326, 0.0
    %v1497 = vmax.f32 %v1328, 0.0
    %v1498 = vmax.f32 %v1490, 0.0
    %v1499 = vmax.f32 %v1492, 0.0
    %v1500 = vpack.c.bf16 %v1496, %v1496
    %v1501 = vpack.c.bf16 %v1497, %v1497
    %v1502 = vpack.c.bf16 %v1498, %v1498
    %v1503 = vpack.c.bf16 %v1499, %v1499
    %s1504 = smul.u32 4, 64
    %s1505 = smul.u32 %s1504, 1
    %s1506 = sshll.u32 %s1505, 4
    %1507 = dma.done %s116, %s1506
    %s1508 = smul.u32 1, 1
    %s1509 = sshll.u32 %s1508, 4
    %1510 = dma.done %s128, %s1509
    %v1511 = vld [vmem:[#allocation4] sm:$0xff]
    %v1512 = vld [vmem:[#allocation4 + $0x8] sm:$0xff]
    %v1513 = vld [vmem:[#allocation4 + $0x10] sm:$0xff]
    %v1514 = vld [vmem:[#allocation4 + $0x18] sm:$0xff]
    %v1515 = vld [vmem:[#allocation4 + $0x20] sm:$0xff]
    %v1516 = vld [vmem:[#allocation4 + $0x28] sm:$0xff]
    %v1517 = vld [vmem:[#allocation4 + $0x30] sm:$0xff]
    %v1518 = vld [vmem:[#allocation4 + $0x38] sm:$0xff]
    %v1519 = vld [vmem:[#allocation4 + $0x40] sm:$0xff]
    %v1520 = vld [vmem:[#allocation4 + $0x48] sm:$0xff]
    %v1521 = vld [vmem:[#allocation4 + $0x50] sm:$0xff]
    %v1522 = vld [vmem:[#allocation4 + $0x58] sm:$0xff]
    %v1523 = vld [vmem:[#allocation4 + $0x60] sm:$0xff]
    %v1524 = vld [vmem:[#allocation4 + $0x68] sm:$0xff]
    %v1525 = vld [vmem:[#allocation4 + $0x70] sm:$0xff]
    %v1526 = vld [vmem:[#allocation4 + $0x78] sm:$0xff]
    %v1527 = vld [vmem:[#allocation4 + $0x80] sm:$0xff]
    %v1528 = vld [vmem:[#allocation4 + $0x88] sm:$0xff]
    %v1529 = vld [vmem:[#allocation4 + $0x90] sm:$0xff]
    %v1530 = vld [vmem:[#allocation4 + $0x98] sm:$0xff]
    %v1531 = vld [vmem:[#allocation4 + $0xa0] sm:$0xff]
    %v1532 = vld [vmem:[#allocation4 + $0xa8] sm:$0xff]
    %v1533 = vld [vmem:[#allocation4 + $0xb0] sm:$0xff]
    %v1534 = vld [vmem:[#allocation4 + $0xb8] sm:$0xff]
    %v1535 = vld [vmem:[#allocation4 + $0xc0] sm:$0xff]
    %v1536 = vld [vmem:[#allocation4 + $0xc8] sm:$0xff]
    %v1537 = vld [vmem:[#allocation4 + $0xd0] sm:$0xff]
    %v1538 = vld [vmem:[#allocation4 + $0xd8] sm:$0xff]
    %v1539 = vld [vmem:[#allocation4 + $0xe0] sm:$0xff]
    %v1540 = vld [vmem:[#allocation4 + $0xe8] sm:$0xff]
    %v1541 = vld [vmem:[#allocation4 + $0xf0] sm:$0xff]
    %v1542 = vld [vmem:[#allocation4 + $0xf8] sm:$0xff]
    %v1543 = vld [vmem:[#allocation5] sm:$0x1]
    %v1545 = vlaneseq
    %v1546 = vshrl.u32 %v1545, 7
    %v1547 = vsub.s32 0, %v1546
    %v1548 = vrot.slane %v1543, %v1547
    %1550 = vmatprep.subr.bf16.mxu0 0
    %1551 = vmatpush1.bf16.msra.mxu0 %v1511
    %1552 = vmatprep.subr.bf16.mxu0 0
    %1553 = vmatpush1.bf16.msra.mxu0 %v1512
    %1554 = vmatprep.subr.bf16.mxu0 0
    %1555 = vmatpush1.bf16.msra.mxu0 %v1513
    %1556 = vmatprep.subr.bf16.mxu0 0
    %1557 = vmatpush1.bf16.msra.mxu0 %v1514
    %1558 = vmatprep.subr.bf16.mxu0 0
    %1559 = vmatpush1.bf16.msra.mxu0 %v1515
    %1560 = vmatprep.subr.bf16.mxu0 0
    %1561 = vmatpush1.bf16.msra.mxu0 %v1516
    %1562 = vmatprep.subr.bf16.mxu0 0
    %1563 = vmatpush1.bf16.msra.mxu0 %v1517
    %1564 = vmatprep.subr.bf16.mxu0 0
    %1565 = vmatpush1.bf16.msra.mxu0 %v1518
    %1566 = vmatprep.subr.bf16.mxu0 0
    %1567 = vmatpush1.bf16.msra.mxu0 %v1519
    %1568 = vmatprep.subr.bf16.mxu0 0
    %1569 = vmatpush1.bf16.msra.mxu0 %v1520
    %1570 = vmatprep.subr.bf16.mxu0 0
    %1571 = vmatpush1.bf16.msra.mxu0 %v1521
    %1572 = vmatprep.subr.bf16.mxu0 0
    %1573 = vmatpush1.bf16.msra.mxu0 %v1522
    %1574 = vmatprep.subr.bf16.mxu0 0
    %1575 = vmatpush1.bf16.msra.mxu0 %v1523
    %1576 = vmatprep.subr.bf16.mxu0 0
    %1577 = vmatpush1.bf16.msra.mxu0 %v1524
    %1578 = vmatprep.subr.bf16.mxu0 0
    %1579 = vmatpush1.bf16.msra.mxu0 %v1525
    %1580 = vmatprep.subr.bf16.mxu0 0
    %1581 = vmatpush1.bf16.msra.mxu0 %v1526
    %1582 = vmatprep.mubr.bf16.mxu0 %v1501
    %1583 = vmatmul.mubr.bf16.gmra.mrb[0].mxu0 %v1500
    %v1584 = vpop.f32.mrb[0].mxu0
    %v1585 = vadd.f32 %v1548, %v1584
    %v1586 = vpop.f32.mrb[0].mxu0
    %v1587 = vpop.f32.mrb[0].mxu0
    %v1588 = vpop.f32.mrb[0].mxu0
    %1589 = vdwg.mxu0
    %1590 = vmatprep.subr.bf16.mxu0 0
    %1591 = vmatpush1.bf16.msra.mxu0 %v1527
    %1592 = vmatprep.subr.bf16.mxu0 0
    %1593 = vmatpush1.bf16.msra.mxu0 %v1528
    %1594 = vmatprep.subr.bf16.mxu0 0
    %1595 = vmatpush1.bf16.msra.mxu0 %v1529
    %1596 = vmatprep.subr.bf16.mxu0 0
    %1597 = vmatpush1.bf16.msra.mxu0 %v1530
    %1598 = vmatprep.subr.bf16.mxu0 0
    %1599 = vmatpush1.bf16.msra.mxu0 %v1531
    %1600 = vmatprep.subr.bf16.mxu0 0
    %1601 = vmatpush1.bf16.msra.mxu0 %v1532
    %1602 = vmatprep.subr.bf16.mxu0 0
    %1603 = vmatpush1.bf16.msra.mxu0 %v1533
    %1604 = vmatprep.subr.bf16.mxu0 0
    %1605 = vmatpush1.bf16.msra.mxu0 %v1534
    %1606 = vmatprep.subr.bf16.mxu0 0
    %1607 = vmatpush1.bf16.msra.mxu0 %v1535
    %1608 = vmatprep.subr.bf16.mxu0 0
    %1609 = vmatpush1.bf16.msra.mxu0 %v1536
    %1610 = vmatprep.subr.bf16.mxu0 0
    %1611 = vmatpush1.bf16.msra.mxu0 %v1537
    %1612 = vmatprep.subr.bf16.mxu0 0
    %1613 = vmatpush1.bf16.msra.mxu0 %v1538
    %1614 = vmatprep.subr.bf16.mxu0 0
    %1615 = vmatpush1.bf16.msra.mxu0 %v1539
    %1616 = vmatprep.subr.bf16.mxu0 0
    %1617 = vmatpush1.bf16.msra.mxu0 %v1540
    %1618 = vmatprep.subr.bf16.mxu0 0
    %1619 = vmatpush1.bf16.msra.mxu0 %v1541
    %1620 = vmatprep.subr.bf16.mxu0 0
    %1621 = vmatpush1.bf16.msra.mxu0 %v1542
    %1622 = vmatprep.mubr.bf16.mxu0 %v1503
    %1623 = vmatmul.mubr.bf16.gmra.mrb[0].mxu0 %v1502
    %v1624 = vpop.f32.mrb[0].mxu0
    %v1625 = vadd.f32 %v1585, %v1624
    %v1626 = vpop.f32.mrb[0].mxu0
    %v1627 = vpop.f32.mrb[0].mxu0
    %v1628 = vpop.f32.mrb[0].mxu0
    %1629 = vdwg.mxu0
    %v1630 = vmax.f32 %v1625, 0.0
    %v1631 = vpack.c.bf16 %v1630, %v1630
    %s1632 = smul.u32 4, 16
    %s1633 = smul.u32 %s1632, 1
    %s1634 = sshll.u32 %s1633, 4
    %1635 = dma.done %s173, %s1634
    %s1636 = sshll.u32 %s1508, 4
    %1637 = dma.done %s230, %s1636
    %v1638 = vld [vmem:[#allocation6] sm:$0xff]
    %v1639 = vld [vmem:[#allocation6 + $0x8] sm:$0xff]
    %v1640 = vld [vmem:[#allocation6 + $0x10] sm:$0xff]
    %v1641 = vld [vmem:[#allocation6 + $0x18] sm:$0xff]
    %v1642 = vld [vmem:[#allocation6 + $0x20] sm:$0xff]
    %v1643 = vld [vmem:[#allocation6 + $0x28] sm:$0xff]
    %v1644 = vld [vmem:[#allocation6 + $0x30] sm:$0xff]
    %v1645 = vld [vmem:[#allocation6 + $0x38] sm:$0xff]
    %v1646 = vld [vmem:[#allocation7] sm:$0x1]
    %v1648 = vlaneseq
    %v1649 = vshrl.u32 %v1648, 7
    %v1650 = vsub.s32 0, %v1649
    %v1651 = vrot.slane %v1646, %v1650
    %1653 = vmatprep.subr.bf16.mxu0 0
    %1654 = vmatpush1.bf16.msra.mxu0 %v1638
    %1655 = vmatprep.subr.bf16.mxu0 0
    %1656 = vmatpush1.bf16.msra.mxu0 %v1639
    %1657 = vmatprep.subr.bf16.mxu0 0
    %1658 = vmatpush1.bf16.msra.mxu0 %v1640
    %1659 = vmatprep.subr.bf16.mxu0 0
    %1660 = vmatpush1.bf16.msra.mxu0 %v1641
    %1661 = vmatprep.subr.bf16.mxu0 0
    %1662 = vmatpush1.bf16.msra.mxu0 %v1642
    %1663 = vmatprep.subr.bf16.mxu0 0
    %1664 = vmatpush1.bf16.msra.mxu0 %v1643
    %1665 = vmatprep.subr.bf16.mxu0 0
    %1666 = vmatpush1.bf16.msra.mxu0 %v1644
    %1667 = vmatprep.subr.bf16.mxu0 0
    %1668 = vmatpush1.bf16.msra.mxu0 %v1645
    %1669 = vmatprep.subr.bf16.mxu0 0
    %1670 = vmatpush1.bf16.msra.mxu0 0
    %1671 = vmatprep.subr.bf16.mxu0 0
    %1672 = vmatpush1.bf16.msra.mxu0 0
    %1673 = vmatprep.subr.bf16.mxu0 0
    %1674 = vmatpush1.bf16.msra.mxu0 0
    %1675 = vmatprep.subr.bf16.mxu0 0
    %1676 = vmatpush1.bf16.msra.mxu0 0
    %1677 = vmatprep.subr.bf16.mxu0 0
    %1678 = vmatpush1.bf16.msra.mxu0 0
    %1679 = vmatprep.subr.bf16.mxu0 0
    %1680 = vmatpush1.bf16.msra.mxu0 0
    %1681 = vmatprep.subr.bf16.mxu0 0
    %1682 = vmatpush1.bf16.msra.mxu0 0
    %1683 = vmatprep.subr.bf16.mxu0 0
    %1684 = vmatpush1.bf16.msra.mxu0 0
    %1685 = vmatprep.mubr.bf16.mxu0 0
    %1686 = vmatmul.mubr.bf16.gmra.mrb[0].mxu0 %v1631
    %v1687 = vpop.f32.mrb[0].mxu0
    %v1688 = vadd.f32 %v1651, %v1687
    %v1689 = vpop.f32.mrb[0].mxu0
    %v1690 = vpop.f32.mrb[0].mxu0
    %v1691 = vpop.f32.mrb[0].mxu0
    %1692 = vdwg.mxu0
    %vm1693 = vcmask 58368
    %1694 = vst.msk [vmem:[#allocation12] sm:$0x3] %vm1693, %v1688
    // Predicated region
    $region146: #{tpu_custom_call.1} parent=1 // pred_check
      _
    $region147: #{tpu_custom_call.1} parent=1 // pred_check_branch
      %1696 = sbr.rel (0) target = $region149
    $region148: #{tpu_custom_call.1} parent=1 // pred_region
      %s1698 = ssub.s32 32, 32
      %1699 = vsyncadd [#allocation11], %s1698
      %s1701 = sshll.u32 [#allocation12], 4
      %s1702 = int_to_ptr.vmem [resolvable:$true] %s1701
      %1704 = dma.vmem_to_hbm [thread:$0]  %s1702, 32, %s9, [#allocation11]
    $region149: #{tpu_custom_call.1} parent=1 // pred_fallthru
      _
    // Predicated region
    $region150: #{tpu_custom_call.1} parent=1 // pred_check
      _
    $region151: #{tpu_custom_call.1} parent=1 // pred_check_branch
      %1706 = sbr.rel (0) target = $region153
    $region152: #{tpu_custom_call.1} parent=1 // pred_region
      %1707 = dma.done [#allocation11], 32
    $region153: #{tpu_custom_call.1} parent=1 // pred_fallthru
      _
    %1708 = vsyncpa [#allocation10], 1
    %1709 = vsyncpa [#allocation11], 1
  %1710 = vsyncmov [#allocation8]
  %s1711 = vpop.sfrf %1710
  %p1712 = scmp.eq.s32.totalorder %s1711, 0
  %p1713 = pneg %p1712
  %1715 = shalt.err (%p1713)
  %s1716 = scalar_lea.sflag [#allocation8], 1
  %1717 = vsyncmov %s1716
  %s1718 = vpop.sfrf %1717
  %p1719 = scmp.eq.s32.totalorder %s1718, 0
  %p1720 = pneg %p1719
  %1722 = shalt.err (%p1720)
  %s1723 = scalar_lea.sflag [#allocation8], 2
  %1724 = vsyncmov %s1723
  %s1725 = vpop.sfrf %1724
  %p1726 = scmp.eq.s32.totalorder %s1725, 0
  %p1727 = pneg %p1726
  %1729 = shalt.err (%p1727)
  %s1730 = scalar_lea.sflag [#allocation8], 3
  %1731 = vsyncmov %s1730
  %s1732 = vpop.sfrf %1731
  %p1733 = scmp.eq.s32.totalorder %s1732, 0
  %p1734 = pneg %p1733
  %1736 = shalt.err (%p1734)
  %s1737 = scalar_lea.sflag [#allocation8], 4
  %1738 = vsyncmov %s1737
  %s1739 = vpop.sfrf %1738
  %p1740 = scmp.eq.s32.totalorder %s1739, 0
  %p1741 = pneg %p1740
  %1743 = shalt.err (%p1741)
  %s1744 = scalar_lea.sflag [#allocation8], 5
  %1745 = vsyncmov %s1744
  %s1746 = vpop.sfrf %1745
  %p1747 = scmp.eq.s32.totalorder %s1746, 0
  %p1748 = pneg %p1747
  %1750 = shalt.err (%p1748)

</llo_original>
